<compile_context>
chip_gen: v5e
topology: v5e:2x2
jax: 0.10.0
libtpu: 0.0.40
codegen_flags: <defaults>
</compile_context>

<pallas_src>
import functools

import jax
import jax.numpy as jnp
import numpy as np
from jax.experimental import pallas as pl
from jax.experimental.pallas import tpu as pltpu


def _round_up(v, m):
    return (v + m - 1) // m * m


# ---------------------------------------------------------------------------
# Fused per-image kernel:
#   (LeakyReLU already folded into xcat)  Conv2d(k4,s2,p1) -> ReLU ->
#   ConvTranspose2d(k4,s2,p1)  + per-image BatchNorm partial statistics.
# ---------------------------------------------------------------------------
def _down_up_kernel(xcat_ref, wd_ref, wu_ref, y_ref, st_ref, dp_ref, *, h1, w1):
    m = h1 * w1
    kcin = xcat_ref.shape[-1]          # 4 * input channels (parity-concatenated)
    ci = dp_ref.shape[-1]              # inner channels, zero-padded to 128 multiple
    co = y_ref.shape[-1]               # outer channels, zero-padded to 128 multiple
    cdt = wd_ref.dtype                 # bf16 matmul operand dtype

    # ---- down path: stride-2 4x4 conv as 4 shifted matmuls with K = 4*cin.
    # xcat[r, s, (ph*2+pw)*cin + c] == leaky(x)_pad[2r+ph, 2s+pw, c]
    # Upcast the (small) plane once to f32 so the shifted value-slices below use
    # the plain (un-packed) relayout path; taps are cast back to bf16 per dot.
    plane = xcat_ref[0].astype(jnp.float32)          # (h1+1, w1+1, 4*cin)
    acc = None
    for a in range(2):
        for b in range(2):
            tap = plane[a:a + h1, b:b + w1, :].reshape(m, kcin).astype(cdt)
            d = jnp.dot(tap, wd_ref[a * 2 + b], preferred_element_type=jnp.float32)
            acc = d if acc is None else acc + d       # (m, ci) f32

    # ---- ReLU; stage the inner map with a 1-pixel zero border in VMEM scratch
    # (the border implements the transposed-conv boundary handling).  Only the
    # border is zeroed, every image: cheap (perimeter, not area) and correct
    # regardless of how the "parallel" grid axis is split across TensorCores.
    zrow = jnp.zeros((1, w1 + 2, ci), dp_ref.dtype)
    zcol = jnp.zeros((h1 + 2, 1, ci), dp_ref.dtype)
    dp_ref[0:1, :, :] = zrow
    dp_ref[h1 + 1:h1 + 2, :, :] = zrow
    dp_ref[:, 0:1, :] = zcol
    dp_ref[:, w1 + 1:w1 + 2, :] = zcol
    dp_ref[1:1 + h1, 1:1 + w1, :] = jnp.maximum(acc, 0.0).reshape(h1, w1, ci)

    # ---- up path: ConvTranspose2d(k4,s2,p1) as 4 output-parity matmuls, each a
    # single (m, 4*ci) @ (4*ci, co) dot (taps concatenated along K):
    #   y[2r+py, 2s+px] += w_up[:, :, 3-py-2a, 3-px-2b]^T . d_pad[r+py+a, s+px+b]
    # BatchNorm partial sums come straight from the f32 results (y is never
    # re-read from HBM just to compute the batch statistics).
    ssum = jnp.zeros((1, co), jnp.float32)
    ssq = jnp.zeros((1, co), jnp.float32)
    for py in range(2):
        for px in range(2):
            taps = [dp_ref[py + a:py + a + h1, px + b:px + b + w1, :]
                    .reshape(m, ci).astype(cdt)
                    for a in range(2) for b in range(2)]
            tap = jnp.concatenate(taps, axis=-1)                   # (m, 4*ci) bf16
            accu = jnp.dot(tap, wu_ref[py * 2 + px],
                           preferred_element_type=jnp.float32)     # (m, co) f32
            y_ref[0, py * 2 + px] = accu.astype(y_ref.dtype)       # lane-dense bf16
            ssum = ssum + jnp.sum(accu, axis=0, keepdims=True)
            ssq = ssq + jnp.sum(accu * accu, axis=0, keepdims=True)
    st_ref[0, 0:1, :] = ssum
    st_ref[0, 1:2, :] = ssq


# ---------------------------------------------------------------------------
# Wrapper: NCHW API boundary, NHWC / parity-ordered inside.
# ---------------------------------------------------------------------------
def unet_innermost_forward(x, w_down, w_up, gamma, beta,
                           *, compute_dtype=jnp.bfloat16, eps=1e-5, slope=0.2):
    N, cin, H, W = x.shape
    inner = w_down.shape[0]
    outer = w_up.shape[1]
    assert w_down.shape == (inner, cin, 4, 4) and w_up.shape == (inner, outer, 4, 4)
    assert H % 2 == 0 and W % 2 == 0
    h1, w1 = H // 2, W // 2
    assert w1 % 8 == 0, "W/2 must be a multiple of 8 (sublane-aligned in-kernel reshapes)"
    m = h1 * w1
    ci = _round_up(inner, 128)     # lane-dense matmul / store channel padding
    co = _round_up(outer, 128)

    # LeakyReLU fused into the (cheap) XLA reorganisation that builds xcat; the
    # kernel input is bf16, halving kernel input DMA.  Matches reference rounding
    # (leaky in f32, then bf16 cast before the conv).
    x_nhwc = jnp.transpose(x, (0, 2, 3, 1)).astype(jnp.float32)
    lx = jnp.where(x_nhwc >= 0, x_nhwc, slope * x_nhwc)
    xp = jnp.pad(lx, ((0, 0), (1, 1), (1, 1), (0, 0)))
    # Parity-concatenated channels: xcat[n,r,s,(ph*2+pw)*cin+c] = xp[n,2r+ph,2s+pw,c]
    xcat = xp.reshape(N, h1 + 1, 2, w1 + 1, 2, cin).transpose(0, 1, 3, 2, 4, 5)
    xcat = xcat.reshape(N, h1 + 1, w1 + 1, 4 * cin).astype(compute_dtype)

    # Down-conv weights, K merged over the 4 input parities:
    #   wd[a*2+b, (ph*2+pw)*cin + c, o] = w_down[o, c, 2a+ph, 2b+pw]
    wdt = jnp.transpose(w_down, (2, 3, 1, 0))            # (kh, kw, cin, inner)
    wd = jnp.stack([
        jnp.concatenate([wdt[2 * a + ph, 2 * b + pw]
                         for ph in range(2) for pw in range(2)], axis=0)
        for a in range(2) for b in range(2)], axis=0)
    wd = jnp.pad(wd, ((0, 0), (0, 0), (0, ci - inner))).astype(compute_dtype)

    # Transposed-conv weights, K merged over the 4 taps of each output parity:
    #   wu[py*2+px, (a*2+b)*ci + c, o] = w_up[c, o, 3-py-2a, 3-px-2b]
    wut = jnp.transpose(w_up, (2, 3, 0, 1))              # (kh, kw, inner, outer)
    wu = jnp.stack([
        jnp.concatenate([
            jnp.pad(wut[3 - py - 2 * a, 3 - px - 2 * b],
                    ((0, ci - inner), (0, co - outer)))
            for a in range(2) for b in range(2)], axis=0)
        for py in range(2) for px in range(2)], axis=0).astype(compute_dtype)

    # ---- fused down-conv / ReLU / up-conv + BN partial stats, per image.
    y_par, stats = pl.pallas_call(
        functools.partial(_down_up_kernel, h1=h1, w1=w1),
        out_shape=(jax.ShapeDtypeStruct((N, 4, m, co), compute_dtype),
                   jax.ShapeDtypeStruct((N, 2, co), jnp.float32)),
        grid=(N,),
        in_specs=[
            pl.BlockSpec((1, h1 + 1, w1 + 1, 4 * cin), lambda n: (n, 0, 0, 0)),
            pl.BlockSpec((4, 4 * cin, ci), lambda n: (0, 0, 0)),
            pl.BlockSpec((4, 4 * ci, co), lambda n: (0, 0, 0)),
        ],
        out_specs=(
            pl.BlockSpec((1, 4, m, co), lambda n: (n, 0, 0, 0)),
            pl.BlockSpec((1, 2, co), lambda n: (n, 0, 0)),
        ),
        scratch_shapes=[pltpu.VMEM((h1 + 2, w1 + 2, ci), jnp.float32)],
        compiler_params=pltpu.CompilerParams(
            dimension_semantics=("parallel",),
            vmem_limit_bytes=64 * 1024 * 1024),
    )(xcat, wd, wu)

    # ---- BatchNorm finalize + affine + skip concat.
    # This is tiny/elementwise work that XLA fuses into the mandatory
    # parity->NCHW boundary transpose (a separate Pallas kernel here would add a
    # full extra HBM round-trip of y, as flagged by the performance review).
    cnt = float(N * H * W)
    ssum = jnp.sum(stats[:, 0, :outer], axis=0)
    ssq = jnp.sum(stats[:, 1, :outer], axis=0)
    mean = ssum / cnt
    var = jnp.maximum(ssq / cnt - mean * mean, 0.0)      # biased variance (PyTorch BN)
    inv = jax.lax.rsqrt(var + eps)
    scale = gamma.astype(jnp.float32) * inv
    shift = beta.astype(jnp.float32) - mean * scale

    y = y_par[..., :outer].astype(jnp.float32) * scale + shift          # (N,4,m,outer)
    y = y.reshape(N, 2, 2, h1, w1, outer).transpose(0, 5, 3, 1, 4, 2)   # parity->NHW
    y = y.reshape(N, outer, H, W).astype(x.dtype)
    return jnp.concatenate([x, y], axis=1)


# ---------------------------------------------------------------------------
# Pure-JAX reference (same bf16-operand / f32-accumulate rounding as the kernel;
# otherwise exact PyTorch semantics incl. biased variance and eps=1e-5).
# ---------------------------------------------------------------------------
def reference_forward(x, w_down, w_up, gamma, beta,
                      *, compute_dtype=jnp.bfloat16, eps=1e-5):
    cd = compute_dtype
    lx = jnp.where(x >= 0, x, 0.2 * x)
    d = jax.lax.conv_general_dilated(
        lx.astype(cd), w_down.astype(cd), (2, 2), ((1, 1), (1, 1)),
        dimension_numbers=("NCHW", "OIHW", "NCHW"),
        preferred_element_type=jnp.float32)
    rd = jnp.maximum(d, 0.0)
    # ConvTranspose2d(s2, p1, k4) == stride-1 conv of the 2x-dilated, pad-2 input
    # with the spatially flipped, in/out-transposed kernel.
    w_conv = w_up[:, :, ::-1, ::-1].transpose(1, 0, 2, 3)
    t = jax.lax.conv_general_dilated(
        rd.astype(cd), w_conv.astype(cd), (1, 1), ((2, 2), (2, 2)),
        lhs_dilation=(2, 2), dimension_numbers=("NCHW", "OIHW", "NCHW"),
        preferred_element_type=jnp.float32)
    mean = t.mean(axis=(0, 2, 3), keepdims=True)
    var = ((t - mean) ** 2).mean(axis=(0, 2, 3), keepdims=True)
    y = (t - mean) * jax.lax.rsqrt(var + eps) * gamma.reshape(1, -1, 1, 1) \
        + beta.reshape(1, -1, 1, 1)
    return jnp.concatenate([x, y], axis=1)


# ---------------------------------------------------------------------------
if __name__ == "__main__":
    # Innermost UnetSkipConnectionBlock: outer_nc = input_nc = 4, inner_nc = 8.
    N, outer_nc, inner_nc, H, W = 2, 4, 8, 16, 16
    input_nc = outer_nc

    key = jax.random.PRNGKey(0)
    kx, kd, ku, kg, kb = jax.random.split(key, 5)

    x = jax.random.normal(kx, (N, input_nc, H, W), dtype=jnp.float32)
    # Conv2d weight: (out=inner_nc, in=input_nc, 4, 4); bias=False (BatchNorm).
    w_down = 0.05 * jax.random.normal(kd, (inner_nc, input_nc, 4, 4), dtype=jnp.float32)
    # ConvTranspose2d weight: (in=inner_nc, out=outer_nc, 4, 4); bias=False.
    w_up = 0.05 * jax.random.normal(ku, (inner_nc, outer_nc, 4, 4), dtype=jnp.float32)
    # BatchNorm2d(outer_nc) affine parameters.
    gamma = 1.0 + 0.1 * jax.random.normal(kg, (outer_nc,), dtype=jnp.float32)
    beta = 0.1 * jax.random.normal(kb, (outer_nc,), dtype=jnp.float32)

    fwd = jax.jit(unet_innermost_forward)
    out = jax.block_until_ready(fwd(x, w_down, w_up, gamma, beta))
    assert out.shape == (N, input_nc + outer_nc, H, W), out.shape

    ref = jax.block_until_ready(jax.jit(reference_forward)(x, w_down, w_up, gamma, beta))
    np.testing.assert_allclose(np.asarray(out), np.asarray(ref), rtol=2e-2, atol=2e-2)

    print("KERNEL_OK")
</pallas_src>

<mosaic_0001>
module attributes {stable_mosaic.version = 11 : i64} {
  func.func @_down_up_kernel(%arg0: i32, %arg1: memref<1x9x9x16xbf16, #tpu.memory_space<vmem>>, %arg2: memref<4x16x128xbf16, #tpu.memory_space<vmem>>, %arg3: memref<4x512x128xbf16, #tpu.memory_space<vmem>>, %arg4: memref<1x4x64x128xbf16, #tpu.memory_space<vmem>>, %arg5: memref<1x2x128xf32, #tpu.memory_space<vmem>>, %arg6: memref<10x10x128xf32, #tpu.memory_space<vmem>>) attributes {dimension_semantics = [#tpu.dimension_semantics<parallel>], iteration_bounds = array<i64: 2>, scalar_prefetch = 0 : i64, scratch_operands = 1 : i64, tpu.core_type = #tpu.core_type<tc>, window_params = [{transform_indices = @transform_0, window_bounds = array<i64: 1, 9, 9, 16>}, {pipeline_mode = #tpu.pipeline_mode<synchronous>, transform_indices = @transform_1, window_bounds = array<i64: 4, 16, 128>}, {pipeline_mode = #tpu.pipeline_mode<synchronous>, transform_indices = @transform_2, window_bounds = array<i64: 4, 512, 128>}, {transform_indices = @transform_3, window_bounds = array<i64: 1, 4, 64, 128>}, {transform_indices = @transform_4, window_bounds = array<i64: 1, 2, 128>}]} {
    %c0 = arith.constant 0 : index
    %c0_0 = arith.constant 0 : index
    %c0_1 = arith.constant 0 : index
    %c0_2 = arith.constant 0 : index
    %0 = vector.load %arg1[%c0, %c0_0, %c0_1, %c0_2] : memref<1x9x9x16xbf16, #tpu.memory_space<vmem>>, vector<1x9x9x16xbf16>
    %1 = vector.shape_cast %0 : vector<1x9x9x16xbf16> to vector<9x9x16xbf16>
    %2 = arith.extf %1 : vector<9x9x16xbf16> to vector<9x9x16xf32>
    %3 = vector.extract_strided_slice %2 {offsets = [0, 0, 0], sizes = [8, 8, 16], strides = [1, 1, 1]} : vector<9x9x16xf32> to vector<8x8x16xf32>
    %4 = vector.shape_cast %3 : vector<8x8x16xf32> to vector<64x16xf32>
    %5 = arith.truncf %4 : vector<64x16xf32> to vector<64x16xbf16>
    %c0_3 = arith.constant 0 : index
    %c0_4 = arith.constant 0 : index
    %c0_5 = arith.constant 0 : index
    %6 = vector.load %arg2[%c0_3, %c0_4, %c0_5] : memref<4x16x128xbf16, #tpu.memory_space<vmem>>, vector<1x16x128xbf16>
    %7 = vector.shape_cast %6 : vector<1x16x128xbf16> to vector<16x128xbf16>
    %cst = arith.constant dense<0.000000e+00> : vector<64x128xf32>
    %8 = tpu.matmul %5, %7, %cst {dimension_numbers = #tpu.dot_dimension_numbers<[1], [0], [0], [1], [0, 0, 1, 1], [], []>} : vector<64x16xbf16>, vector<16x128xbf16>, vector<64x128xf32> -> vector<64x128xf32>
    %9 = vector.extract_strided_slice %2 {offsets = [0, 1, 0], sizes = [8, 8, 16], strides = [1, 1, 1]} : vector<9x9x16xf32> to vector<8x8x16xf32>
    %10 = vector.shape_cast %9 : vector<8x8x16xf32> to vector<64x16xf32>
    %11 = arith.truncf %10 : vector<64x16xf32> to vector<64x16xbf16>
    %c1 = arith.constant 1 : index
    %c0_6 = arith.constant 0 : index
    %c0_7 = arith.constant 0 : index
    %12 = vector.load %arg2[%c1, %c0_6, %c0_7] : memref<4x16x128xbf16, #tpu.memory_space<vmem>>, vector<1x16x128xbf16>
    %13 = vector.shape_cast %12 : vector<1x16x128xbf16> to vector<16x128xbf16>
    %cst_8 = arith.constant dense<0.000000e+00> : vector<64x128xf32>
    %14 = tpu.matmul %11, %13, %cst_8 {dimension_numbers = #tpu.dot_dimension_numbers<[1], [0], [0], [1], [0, 0, 1, 1], [], []>} : vector<64x16xbf16>, vector<16x128xbf16>, vector<64x128xf32> -> vector<64x128xf32>
    %15 = arith.addf %8, %14 : vector<64x128xf32>
    %16 = vector.extract_strided_slice %2 {offsets = [1, 0, 0], sizes = [8, 8, 16], strides = [1, 1, 1]} : vector<9x9x16xf32> to vector<8x8x16xf32>
    %17 = vector.shape_cast %16 : vector<8x8x16xf32> to vector<64x16xf32>
    %18 = arith.truncf %17 : vector<64x16xf32> to vector<64x16xbf16>
    %c2 = arith.constant 2 : index
    %c0_9 = arith.constant 0 : index
    %c0_10 = arith.constant 0 : index
    %19 = vector.load %arg2[%c2, %c0_9, %c0_10] : memref<4x16x128xbf16, #tpu.memory_space<vmem>>, vector<1x16x128xbf16>
    %20 = vector.shape_cast %19 : vector<1x16x128xbf16> to vector<16x128xbf16>
    %cst_11 = arith.constant dense<0.000000e+00> : vector<64x128xf32>
    %21 = tpu.matmul %18, %20, %cst_11 {dimension_numbers = #tpu.dot_dimension_numbers<[1], [0], [0], [1], [0, 0, 1, 1], [], []>} : vector<64x16xbf16>, vector<16x128xbf16>, vector<64x128xf32> -> vector<64x128xf32>
    %22 = arith.addf %15, %21 : vector<64x128xf32>
    %23 = vector.extract_strided_slice %2 {offsets = [1, 1, 0], sizes = [8, 8, 16], strides = [1, 1, 1]} : vector<9x9x16xf32> to vector<8x8x16xf32>
    %24 = vector.shape_cast %23 : vector<8x8x16xf32> to vector<64x16xf32>
    %25 = arith.truncf %24 : vector<64x16xf32> to vector<64x16xbf16>
    %c3 = arith.constant 3 : index
    %c0_12 = arith.constant 0 : index
    %c0_13 = arith.constant 0 : index
    %26 = vector.load %arg2[%c3, %c0_12, %c0_13] : memref<4x16x128xbf16, #tpu.memory_space<vmem>>, vector<1x16x128xbf16>
    %27 = vector.shape_cast %26 : vector<1x16x128xbf16> to vector<16x128xbf16>
    %cst_14 = arith.constant dense<0.000000e+00> : vector<64x128xf32>
    %28 = tpu.matmul %25, %27, %cst_14 {dimension_numbers = #tpu.dot_dimension_numbers<[1], [0], [0], [1], [0, 0, 1, 1], [], []>} : vector<64x16xbf16>, vector<16x128xbf16>, vector<64x128xf32> -> vector<64x128xf32>
    %29 = arith.addf %22, %28 : vector<64x128xf32>
    %cst_15 = arith.constant 0.000000e+00 : f32
    %30 = vector.broadcast %cst_15 : f32 to vector<1x10x128xf32>
    %cst_16 = arith.constant 0.000000e+00 : f32
    %31 = vector.broadcast %cst_16 : f32 to vector<10x1x128xf32>
    %c0_17 = arith.constant 0 : index
    %c0_18 = arith.constant 0 : index
    %c0_19 = arith.constant 0 : index
    %32 = vector.load %arg6[%c0_17, %c0_18, %c0_19] : memref<10x10x128xf32, #tpu.memory_space<vmem>>, vector<1x10x128xf32>
    tpu.vector_store %arg6[%c0_17, %c0_18, %c0_19], %30 {strides = array<i32>} : memref<10x10x128xf32, #tpu.memory_space<vmem>>, vector<1x10x128xf32>,
    %c9 = arith.constant 9 : index
    %c0_20 = arith.constant 0 : index
    %c0_21 = arith.constant 0 : index
    %33 = vector.load %arg6[%c9, %c0_20, %c0_21] : memref<10x10x128xf32, #tpu.memory_space<vmem>>, vector<1x10x128xf32>
    tpu.vector_store %arg6[%c9, %c0_20, %c0_21], %30 {strides = array<i32>} : memref<10x10x128xf32, #tpu.memory_space<vmem>>, vector<1x10x128xf32>,
    %c0_22 = arith.constant 0 : index
    %c0_23 = arith.constant 0 : index
    %c0_24 = arith.constant 0 : index
    %34 = vector.load %arg6[%c0_22, %c0_23, %c0_24] : memref<10x10x128xf32, #tpu.memory_space<vmem>>, vector<10x1x128xf32>
    tpu.vector_store %arg6[%c0_22, %c0_23, %c0_24], %31 {strides = array<i32>} : memref<10x10x128xf32, #tpu.memory_space<vmem>>, vector<10x1x128xf32>,
    %c0_25 = arith.constant 0 : index
    %c9_26 = arith.constant 9 : index
    %c0_27 = arith.constant 0 : index
    %35 = vector.load %arg6[%c0_25, %c9_26, %c0_27] : memref<10x10x128xf32, #tpu.memory_space<vmem>>, vector<10x1x128xf32>
    tpu.vector_store %arg6[%c0_25, %c9_26, %c0_27], %31 {strides = array<i32>} : memref<10x10x128xf32, #tpu.memory_space<vmem>>, vector<10x1x128xf32>,
    %cst_28 = arith.constant 0.000000e+00 : f32
    %36 = vector.broadcast %cst_28 : f32 to vector<64x128xf32>
    %37 = arith.maximumf %29, %36 : vector<64x128xf32>
    %38 = vector.shape_cast %37 : vector<64x128xf32> to vector<8x8x128xf32>
    %c1_29 = arith.constant 1 : index
    %c1_30 = arith.constant 1 : index
    %c0_31 = arith.constant 0 : index
    %39 = vector.load %arg6[%c1_29, %c1_30, %c0_31] : memref<10x10x128xf32, #tpu.memory_space<vmem>>, vector<8x8x128xf32>
    tpu.vector_store %arg6[%c1_29, %c1_30, %c0_31], %38 {strides = array<i32>} : memref<10x10x128xf32, #tpu.memory_space<vmem>>, vector<8x8x128xf32>,
    %cst_32 = arith.constant 0.000000e+00 : f32
    %40 = vector.broadcast %cst_32 : f32 to vector<1x128xf32>
    %cst_33 = arith.constant 0.000000e+00 : f32
    %41 = vector.broadcast %cst_33 : f32 to vector<1x128xf32>
    %c0_34 = arith.constant 0 : index
    %c0_35 = arith.constant 0 : index
    %c0_36 = arith.constant 0 : index
    %42 = vector.load %arg6[%c0_34, %c0_35, %c0_36] : memref<10x10x128xf32, #tpu.memory_space<vmem>>, vector<8x8x128xf32>
    %43 = vector.shape_cast %42 : vector<8x8x128xf32> to vector<64x128xf32>
    %44 = arith.truncf %43 : vector<64x128xf32> to vector<64x128xbf16>
    %c0_37 = arith.constant 0 : index
    %c1_38 = arith.constant 1 : index
    %c0_39 = arith.constant 0 : index
    %45 = vector.load %arg6[%c0_37, %c1_38, %c0_39] : memref<10x10x128xf32, #tpu.memory_space<vmem>>, vector<8x8x128xf32>
    %46 = vector.shape_cast %45 : vector<8x8x128xf32> to vector<64x128xf32>
    %47 = arith.truncf %46 : vector<64x128xf32> to vector<64x128xbf16>
    %c1_40 = arith.constant 1 : index
    %c0_41 = arith.constant 0 : index
    %c0_42 = arith.constant 0 : index
    %48 = vector.load %arg6[%c1_40, %c0_41, %c0_42] : memref<10x10x128xf32, #tpu.memory_space<vmem>>, vector<8x8x128xf32>
    %49 = vector.shape_cast %48 : vector<8x8x128xf32> to vector<64x128xf32>
    %50 = arith.truncf %49 : vector<64x128xf32> to vector<64x128xbf16>
    %c1_43 = arith.constant 1 : index
    %c1_44 = arith.constant 1 : index
    %c0_45 = arith.constant 0 : index
    %51 = vector.load %arg6[%c1_43, %c1_44, %c0_45] : memref<10x10x128xf32, #tpu.memory_space<vmem>>, vector<8x8x128xf32>
    %52 = vector.shape_cast %51 : vector<8x8x128xf32> to vector<64x128xf32>
    %53 = arith.truncf %52 : vector<64x128xf32> to vector<64x128xbf16>
    %54 = tpu.concatenate %44, %47, %50, %53 in 1 : vector<64x128xbf16>, vector<64x128xbf16>, vector<64x128xbf16>, vector<64x128xbf16> -> vector<64x512xbf16>
    %c0_46 = arith.constant 0 : index
    %c0_47 = arith.constant 0 : index
    %c0_48 = arith.constant 0 : index
    %55 = vector.load %arg3[%c0_46, %c0_47, %c0_48] : memref<4x512x128xbf16, #tpu.memory_space<vmem>>, vector<1x512x128xbf16>
    %56 = vector.shape_cast %55 : vector<1x512x128xbf16> to vector<512x128xbf16>
    %cst_49 = arith.constant dense<0.000000e+00> : vector<64x128xf32>
    %57 = tpu.matmul %54, %56, %cst_49 {dimension_numbers = #tpu.dot_dimension_numbers<[1], [0], [0], [1], [0, 0, 1, 1], [], []>} : vector<64x512xbf16>, vector<512x128xbf16>, vector<64x128xf32> -> vector<64x128xf32>
    %58 = arith.truncf %57 : vector<64x128xf32> to vector<64x128xbf16>
    %c0_50 = arith.constant 0 : index
    %c0_51 = arith.constant 0 : index
    %c0_52 = arith.constant 0 : index
    %c0_53 = arith.constant 0 : index
    %59 = vector.load %arg4[%c0_50, %c0_51, %c0_52, %c0_53] : memref<1x4x64x128xbf16, #tpu.memory_space<vmem>>, vector<1x1x64x128xbf16>
    %60 = vector.shape_cast %59 : vector<1x1x64x128xbf16> to vector<64x128xbf16>
    %61 = vector.shape_cast %58 : vector<64x128xbf16> to vector<1x1x64x128xbf16>
    tpu.vector_store %arg4[%c0_50, %c0_51, %c0_52, %c0_53], %61 {strides = array<i32>} : memref<1x4x64x128xbf16, #tpu.memory_space<vmem>>, vector<1x1x64x128xbf16>,
    %cst_54 = arith.constant dense<0.000000e+00> : vector<128xf32>
    %62 = vector.multi_reduction <add>, %57, %cst_54 [0] : vector<64x128xf32> to vector<128xf32>
    %63 = vector.shape_cast %62 : vector<128xf32> to vector<1x128xf32>
    %64 = arith.addf %40, %63 : vector<1x128xf32>
    %65 = arith.mulf %57, %57 : vector<64x128xf32>
    %cst_55 = arith.constant dense<0.000000e+00> : vector<128xf32>
    %66 = vector.multi_reduction <add>, %65, %cst_55 [0] : vector<64x128xf32> to vector<128xf32>
    %67 = vector.shape_cast %66 : vector<128xf32> to vector<1x128xf32>
    %68 = arith.addf %41, %67 : vector<1x128xf32>
    %c0_56 = arith.constant 0 : index
    %c1_57 = arith.constant 1 : index
    %c0_58 = arith.constant 0 : index
    %69 = vector.load %arg6[%c0_56, %c1_57, %c0_58] : memref<10x10x128xf32, #tpu.memory_space<vmem>>, vector<8x8x128xf32>
    %70 = vector.shape_cast %69 : vector<8x8x128xf32> to vector<64x128xf32>
    %71 = arith.truncf %70 : vector<64x128xf32> to vector<64x128xbf16>
    %c0_59 = arith.constant 0 : index
    %c2_60 = arith.constant 2 : index
    %c0_61 = arith.constant 0 : index
    %72 = vector.load %arg6[%c0_59, %c2_60, %c0_61] : memref<10x10x128xf32, #tpu.memory_space<vmem>>, vector<8x8x128xf32>
    %73 = vector.shape_cast %72 : vector<8x8x128xf32> to vector<64x128xf32>
    %74 = arith.truncf %73 : vector<64x128xf32> to vector<64x128xbf16>
    %c1_62 = arith.constant 1 : index
    %c1_63 = arith.constant 1 : index
    %c0_64 = arith.constant 0 : index
    %75 = vector.load %arg6[%c1_62, %c1_63, %c0_64] : memref<10x10x128xf32, #tpu.memory_space<vmem>>, vector<8x8x128xf32>
    %76 = vector.shape_cast %75 : vector<8x8x128xf32> to vector<64x128xf32>
    %77 = arith.truncf %76 : vector<64x128xf32> to vector<64x128xbf16>
    %c1_65 = arith.constant 1 : index
    %c2_66 = arith.constant 2 : index
    %c0_67 = arith.constant 0 : index
    %78 = vector.load %arg6[%c1_65, %c2_66, %c0_67] : memref<10x10x128xf32, #tpu.memory_space<vmem>>, vector<8x8x128xf32>
    %79 = vector.shape_cast %78 : vector<8x8x128xf32> to vector<64x128xf32>
    %80 = arith.truncf %79 : vector<64x128xf32> to vector<64x128xbf16>
    %81 = tpu.concatenate %71, %74, %77, %80 in 1 : vector<64x128xbf16>, vector<64x128xbf16>, vector<64x128xbf16>, vector<64x128xbf16> -> vector<64x512xbf16>
    %c1_68 = arith.constant 1 : index
    %c0_69 = arith.constant 0 : index
    %c0_70 = arith.constant 0 : index
    %82 = vector.load %arg3[%c1_68, %c0_69, %c0_70] : memref<4x512x128xbf16, #tpu.memory_space<vmem>>, vector<1x512x128xbf16>
    %83 = vector.shape_cast %82 : vector<1x512x128xbf16> to vector<512x128xbf16>
    %cst_71 = arith.constant dense<0.000000e+00> : vector<64x128xf32>
    %84 = tpu.matmul %81, %83, %cst_71 {dimension_numbers = #tpu.dot_dimension_numbers<[1], [0], [0], [1], [0, 0, 1, 1], [], []>} : vector<64x512xbf16>, vector<512x128xbf16>, vector<64x128xf32> -> vector<64x128xf32>
    %85 = arith.truncf %84 : vector<64x128xf32> to vector<64x128xbf16>
    %c0_72 = arith.constant 0 : index
    %c1_73 = arith.constant 1 : index
    %c0_74 = arith.constant 0 : index
    %c0_75 = arith.constant 0 : index
    %86 = vector.load %arg4[%c0_72, %c1_73, %c0_74, %c0_75] : memref<1x4x64x128xbf16, #tpu.memory_space<vmem>>, vector<1x1x64x128xbf16>
    %87 = vector.shape_cast %86 : vector<1x1x64x128xbf16> to vector<64x128xbf16>
    %88 = vector.shape_cast %85 : vector<64x128xbf16> to vector<1x1x64x128xbf16>
    tpu.vector_store %arg4[%c0_72, %c1_73, %c0_74, %c0_75], %88 {strides = array<i32>} : memref<1x4x64x128xbf16, #tpu.memory_space<vmem>>, vector<1x1x64x128xbf16>,
    %cst_76 = arith.constant dense<0.000000e+00> : vector<128xf32>
    %89 = vector.multi_reduction <add>, %84, %cst_76 [0] : vector<64x128xf32> to vector<128xf32>
    %90 = vector.shape_cast %89 : vector<128xf32> to vector<1x128xf32>
    %91 = arith.addf %64, %90 : vector<1x128xf32>
    %92 = arith.mulf %84, %84 : vector<64x128xf32>
    %cst_77 = arith.constant dense<0.000000e+00> : vector<128xf32>
    %93 = vector.multi_reduction <add>, %92, %cst_77 [0] : vector<64x128xf32> to vector<128xf32>
    %94 = vector.shape_cast %93 : vector<128xf32> to vector<1x128xf32>
    %95 = arith.addf %68, %94 : vector<1x128xf32>
    %c1_78 = arith.constant 1 : index
    %c0_79 = arith.constant 0 : index
    %c0_80 = arith.constant 0 : index
    %96 = vector.load %arg6[%c1_78, %c0_79, %c0_80] : memref<10x10x128xf32, #tpu.memory_space<vmem>>, vector<8x8x128xf32>
    %97 = vector.shape_cast %96 : vector<8x8x128xf32> to vector<64x128xf32>
    %98 = arith.truncf %97 : vector<64x128xf32> to vector<64x128xbf16>
    %c1_81 = arith.constant 1 : index
    %c1_82 = arith.constant 1 : index
    %c0_83 = arith.constant 0 : index
    %99 = vector.load %arg6[%c1_81, %c1_82, %c0_83] : memref<10x10x128xf32, #tpu.memory_space<vmem>>, vector<8x8x128xf32>
    %100 = vector.shape_cast %99 : vector<8x8x128xf32> to vector<64x128xf32>
    %101 = arith.truncf %100 : vector<64x128xf32> to vector<64x128xbf16>
    %c2_84 = arith.constant 2 : index
    %c0_85 = arith.constant 0 : index
    %c0_86 = arith.constant 0 : index
    %102 = vector.load %arg6[%c2_84, %c0_85, %c0_86] : memref<10x10x128xf32, #tpu.memory_space<vmem>>, vector<8x8x128xf32>
    %103 = vector.shape_cast %102 : vector<8x8x128xf32> to vector<64x128xf32>
    %104 = arith.truncf %103 : vector<64x128xf32> to vector<64x128xbf16>
    %c2_87 = arith.constant 2 : index
    %c1_88 = arith.constant 1 : index
    %c0_89 = arith.constant 0 : index
    %105 = vector.load %arg6[%c2_87, %c1_88, %c0_89] : memref<10x10x128xf32, #tpu.memory_space<vmem>>, vector<8x8x128xf32>
    %106 = vector.shape_cast %105 : vector<8x8x128xf32> to vector<64x128xf32>
    %107 = arith.truncf %106 : vector<64x128xf32> to vector<64x128xbf16>
    %108 = tpu.concatenate %98, %101, %104, %107 in 1 : vector<64x128xbf16>, vector<64x128xbf16>, vector<64x128xbf16>, vector<64x128xbf16> -> vector<64x512xbf16>
    %c2_90 = arith.constant 2 : index
    %c0_91 = arith.constant 0 : index
    %c0_92 = arith.constant 0 : index
    %109 = vector.load %arg3[%c2_90, %c0_91, %c0_92] : memref<4x512x128xbf16, #tpu.memory_space<vmem>>, vector<1x512x128xbf16>
    %110 = vector.shape_cast %109 : vector<1x512x128xbf16> to vector<512x128xbf16>
    %cst_93 = arith.constant dense<0.000000e+00> : vector<64x128xf32>
    %111 = tpu.matmul %108, %110, %cst_93 {dimension_numbers = #tpu.dot_dimension_numbers<[1], [0], [0], [1], [0, 0, 1, 1], [], []>} : vector<64x512xbf16>, vector<512x128xbf16>, vector<64x128xf32> -> vector<64x128xf32>
    %112 = arith.truncf %111 : vector<64x128xf32> to vector<64x128xbf16>
    %c0_94 = arith.constant 0 : index
    %c2_95 = arith.constant 2 : index
    %c0_96 = arith.constant 0 : index
    %c0_97 = arith.constant 0 : index
    %113 = vector.load %arg4[%c0_94, %c2_95, %c0_96, %c0_97] : memref<1x4x64x128xbf16, #tpu.memory_space<vmem>>, vector<1x1x64x128xbf16>
    %114 = vector.shape_cast %113 : vector<1x1x64x128xbf16> to vector<64x128xbf16>
    %115 = vector.shape_cast %112 : vector<64x128xbf16> to vector<1x1x64x128xbf16>
    tpu.vector_store %arg4[%c0_94, %c2_95, %c0_96, %c0_97], %115 {strides = array<i32>} : memref<1x4x64x128xbf16, #tpu.memory_space<vmem>>, vector<1x1x64x128xbf16>,
    %cst_98 = arith.constant dense<0.000000e+00> : vector<128xf32>
    %116 = vector.multi_reduction <add>, %111, %cst_98 [0] : vector<64x128xf32> to vector<128xf32>
    %117 = vector.shape_cast %116 : vector<128xf32> to vector<1x128xf32>
    %118 = arith.addf %91, %117 : vector<1x128xf32>
    %119 = arith.mulf %111, %111 : vector<64x128xf32>
    %cst_99 = arith.constant dense<0.000000e+00> : vector<128xf32>
    %120 = vector.multi_reduction <add>, %119, %cst_99 [0] : vector<64x128xf32> to vector<128xf32>
    %121 = vector.shape_cast %120 : vector<128xf32> to vector<1x128xf32>
    %122 = arith.addf %95, %121 : vector<1x128xf32>
    %c1_100 = arith.constant 1 : index
    %c1_101 = arith.constant 1 : index
    %c0_102 = arith.constant 0 : index
    %123 = vector.load %arg6[%c1_100, %c1_101, %c0_102] : memref<10x10x128xf32, #tpu.memory_space<vmem>>, vector<8x8x128xf32>
    %124 = vector.shape_cast %123 : vector<8x8x128xf32> to vector<64x128xf32>
    %125 = arith.truncf %124 : vector<64x128xf32> to vector<64x128xbf16>
    %c1_103 = arith.constant 1 : index
    %c2_104 = arith.constant 2 : index
    %c0_105 = arith.constant 0 : index
    %126 = vector.load %arg6[%c1_103, %c2_104, %c0_105] : memref<10x10x128xf32, #tpu.memory_space<vmem>>, vector<8x8x128xf32>
    %127 = vector.shape_cast %126 : vector<8x8x128xf32> to vector<64x128xf32>
    %128 = arith.truncf %127 : vector<64x128xf32> to vector<64x128xbf16>
    %c2_106 = arith.constant 2 : index
    %c1_107 = arith.constant 1 : index
    %c0_108 = arith.constant 0 : index
    %129 = vector.load %arg6[%c2_106, %c1_107, %c0_108] : memref<10x10x128xf32, #tpu.memory_space<vmem>>, vector<8x8x128xf32>
    %130 = vector.shape_cast %129 : vector<8x8x128xf32> to vector<64x128xf32>
    %131 = arith.truncf %130 : vector<64x128xf32> to vector<64x128xbf16>
    %c2_109 = arith.constant 2 : index
    %c2_110 = arith.constant 2 : index
    %c0_111 = arith.constant 0 : index
    %132 = vector.load %arg6[%c2_109, %c2_110, %c0_111] : memref<10x10x128xf32, #tpu.memory_space<vmem>>, vector<8x8x128xf32>
    %133 = vector.shape_cast %132 : vector<8x8x128xf32> to vector<64x128xf32>
    %134 = arith.truncf %133 : vector<64x128xf32> to vector<64x128xbf16>
    %135 = tpu.concatenate %125, %128, %131, %134 in 1 : vector<64x128xbf16>, vector<64x128xbf16>, vector<64x128xbf16>, vector<64x128xbf16> -> vector<64x512xbf16>
    %c3_112 = arith.constant 3 : index
    %c0_113 = arith.constant 0 : index
    %c0_114 = arith.constant 0 : index
    %136 = vector.load %arg3[%c3_112, %c0_113, %c0_114] : memref<4x512x128xbf16, #tpu.memory_space<vmem>>, vector<1x512x128xbf16>
    %137 = vector.shape_cast %136 : vector<1x512x128xbf16> to vector<512x128xbf16>
    %cst_115 = arith.constant dense<0.000000e+00> : vector<64x128xf32>
    %138 = tpu.matmul %135, %137, %cst_115 {dimension_numbers = #tpu.dot_dimension_numbers<[1], [0], [0], [1], [0, 0, 1, 1], [], []>} : vector<64x512xbf16>, vector<512x128xbf16>, vector<64x128xf32> -> vector<64x128xf32>
    %139 = arith.truncf %138 : vector<64x128xf32> to vector<64x128xbf16>
    %c0_116 = arith.constant 0 : index
    %c3_117 = arith.constant 3 : index
    %c0_118 = arith.constant 0 : index
    %c0_119 = arith.constant 0 : index
    %140 = vector.load %arg4[%c0_116, %c3_117, %c0_118, %c0_119] : memref<1x4x64x128xbf16, #tpu.memory_space<vmem>>, vector<1x1x64x128xbf16>
    %141 = vector.shape_cast %140 : vector<1x1x64x128xbf16> to vector<64x128xbf16>
    %142 = vector.shape_cast %139 : vector<64x128xbf16> to vector<1x1x64x128xbf16>
    tpu.vector_store %arg4[%c0_116, %c3_117, %c0_118, %c0_119], %142 {strides = array<i32>} : memref<1x4x64x128xbf16, #tpu.memory_space<vmem>>, vector<1x1x64x128xbf16>,
    %cst_120 = arith.constant dense<0.000000e+00> : vector<128xf32>
    %143 = vector.multi_reduction <add>, %138, %cst_120 [0] : vector<64x128xf32> to vector<128xf32>
    %144 = vector.shape_cast %143 : vector<128xf32> to vector<1x128xf32>
    %145 = arith.addf %118, %144 : vector<1x128xf32>
    %146 = arith.mulf %138, %138 : vector<64x128xf32>
    %cst_121 = arith.constant dense<0.000000e+00> : vector<128xf32>
    %147 = vector.multi_reduction <add>, %146, %cst_121 [0] : vector<64x128xf32> to vector<128xf32>
    %148 = vector.shape_cast %147 : vector<128xf32> to vector<1x128xf32>
    %149 = arith.addf %122, %148 : vector<1x128xf32>
    %c0_122 = arith.constant 0 : index
    %c0_123 = arith.constant 0 : index
    %c0_124 = arith.constant 0 : index
    %150 = vector.load %arg5[%c0_122, %c0_123, %c0_124] : memref<1x2x128xf32, #tpu.memory_space<vmem>>, vector<1x1x128xf32>
    %151 = vector.shape_cast %150 : vector<1x1x128xf32> to vector<1x128xf32>
    %152 = vector.shape_cast %145 : vector<1x128xf32> to vector<1x1x128xf32>
    tpu.vector_store %arg5[%c0_122, %c0_123, %c0_124], %152 {strides = array<i32>} : memref<1x2x128xf32, #tpu.memory_space<vmem>>, vector<1x1x128xf32>,
    %c0_125 = arith.constant 0 : index
    %c1_126 = arith.constant 1 : index
    %c0_127 = arith.constant 0 : index
    %153 = vector.load %arg5[%c0_125, %c1_126, %c0_127] : memref<1x2x128xf32, #tpu.memory_space<vmem>>, vector<1x1x128xf32>
    %154 = vector.shape_cast %153 : vector<1x1x128xf32> to vector<1x128xf32>
    %155 = vector.shape_cast %149 : vector<1x128xf32> to vector<1x1x128xf32>
    tpu.vector_store %arg5[%c0_125, %c1_126, %c0_127], %155 {strides = array<i32>} : memref<1x2x128xf32, #tpu.memory_space<vmem>>, vector<1x1x128xf32>,
    return
  }
  func.func @transform_0(%arg0: i32) -> (i32, i32, i32, i32) {
    %c0_i32 = arith.constant 0 : i32
    %c0_i32_0 = arith.constant 0 : i32
    %c0_i32_1 = arith.constant 0 : i32
    %c0_i32_2 = arith.constant 0 : i32
    return %arg0, %c0_i32, %c0_i32_0, %c0_i32_1 : i32, i32, i32, i32
  }
  func.func @transform_1(%arg0: i32) -> (i32, i32, i32) {
    %c0_i32 = arith.constant 0 : i32
    %c0_i32_0 = arith.constant 0 : i32
    %c0_i32_1 = arith.constant 0 : i32
    %c0_i32_2 = arith.constant 0 : i32
    return %c0_i32, %c0_i32_0, %c0_i32_1 : i32, i32, i32
  }
  func.func @transform_2(%arg0: i32) -> (i32, i32, i32) {
    %c0_i32 = arith.constant 0 : i32
    %c0_i32_0 = arith.constant 0 : i32
    %c0_i32_1 = arith.constant 0 : i32
    %c0_i32_2 = arith.constant 0 : i32
    return %c0_i32, %c0_i32_0, %c0_i32_1 : i32, i32, i32
  }
  func.func @transform_3(%arg0: i32) -> (i32, i32, i32, i32) {
    %c0_i32 = arith.constant 0 : i32
    %c0_i32_0 = arith.constant 0 : i32
    %c0_i32_1 = arith.constant 0 : i32
    %c0_i32_2 = arith.constant 0 : i32
    return %arg0, %c0_i32, %c0_i32_0, %c0_i32_1 : i32, i32, i32, i32
  }
  func.func @transform_4(%arg0: i32) -> (i32, i32, i32) {
    %c0_i32 = arith.constant 0 : i32
    %c0_i32_0 = arith.constant 0 : i32
    %c0_i32_1 = arith.constant 0 : i32
    return %arg0, %c0_i32, %c0_i32_0 : i32, i32, i32
  }
}

</mosaic_0001>

<llo_original>
// kernel: unet_innermost_forward.1
$region0: #{unet_innermost_forward.1}
  #allocation0 [shape = 'u32[]', space=smem, size = 0x4, offset = 0x4, fixed_abs, tag = 'smem constant byte address 0x4 - core index']
  #allocation1 [shape = 'u32[72,128]{1,0:T(1,128)}', space=vmem, size = 0x9000, scoped, tag = 'internal scratch']
  #allocation2 [shape = 'f32[10,10,128]{2,1,0:T(8,128)}', space=vmem, size = 0x14000, scoped, tag = 'scratch operand']
  %s0 = inlined_call_operand.vmem [shape: bf16[2,9,9,16], index: 0, kind: input, shape index: {}]
  %s1 = inlined_call_operand.vmem [shape: bf16[4,16,128], index: 1, kind: input, shape index: {}]
  %s2 = inlined_call_operand.vmem [shape: bf16[4,512,128], index: 2, kind: input, shape index: {}]
  %s3 = inlined_call_operand.vmem [shape: bf16[2,4,64,128], index: 3, kind: output, shape index: {0}]
  %s4 = inlined_call_operand.vmem [shape: f32[2,2,128], index: 4, kind: output, shape index: {1}]
  %5 = xla_tuple %s3, %s4
  %s6 = sld [smem:[#allocation0]]
  $region53: #{unet_innermost_forward.1} parent=0
    _
  %s8 = ssub.s32 1, %s6
  %s9 = scalar_select 0, %s8, %s6
  loop: start=0, step=1, limit=4
  $region2: #{unet_innermost_forward.1} parent=0 // loop_pre_header
    _
  $region3: #{unet_innermost_forward.1} parent=0 // loop_header
    %s11 = sphi 0, %s15
    %p12 = scmp.ge.s32.totalorder %s11, 4
    %s21 = sphi 0, %s23
    %s24 = sphi 0, %s21
    %s25 = sphi 0, %s24
    %s41 = sphi 0, %s25
    %s45 = sphi 0, %s45
    %s47 = sphi 0, %s45
    %s48 = sphi 0, %s47
    %s62 = sphi 0, %s48
    %s66 = sphi 0, %s66
    %s68 = sphi 0, %s66
    %s69 = sphi 0, %s68
    %s83 = sphi 0, %s69
    %s89 = sphi 0, %s91
    %s92 = sphi 0, %s89
    %s93 = sphi 0, %s92
    %s109 = sphi 0, %s93
    %s115 = sphi 0, %s117
    %s118 = sphi 0, %s115
    %s119 = sphi 0, %s118
    %s135 = sphi 0, %s119
  $region4: #{unet_innermost_forward.1} parent=0 // loop_header_branch
    %14 = sbr.rel (%p12) target = $region8
  $region5: #{unet_innermost_forward.1} parent=0 // loop_body
    %s16 = ssub.s32 %s11, 1
    %s17 = ssub.s32 %s11, 2
    %s18 = sadd.s32 %s11, 1
    %s19 = ssub.s32 %s11, %s18
    %p20 = scmp.eq.s32.totalorder %s19, 0
    %s22 = sadd.s32 %s21, 1
    %s23 = scalar_select %p20, %s21, %s22
    %p26 = pneg %p20
    %p27 = scmp.eq.s32.totalorder %s11, 1
    %p28 = por %p26, %p27
    %p29 = scmp.ne.s32.totalorder %s21, %s24
    %p30 = scmp.eq.s32.totalorder %s11, 0
    %p31 = por %p29, %p30
    %p32 = scmp.ne.s32.totalorder %s21, %s24
    %p33 = scmp.eq.s32.totalorder %s16, 1
    %p34 = por %p32, %p33
    %p35 = scmp.ne.s32.totalorder %s24, %s25
    %p36 = scmp.eq.s32.totalorder %s16, 0
    %p37 = por %p35, %p36
    %p38 = scmp.ne.s32.totalorder %s24, %s25
    %p39 = scmp.eq.s32.totalorder %s17, 1
    %p40 = por %p38, %p39
    %p42 = scmp.ne.s32.totalorder %s25, %s41
    %p43 = scmp.eq.s32.totalorder %s17, 0
    %p44 = por %p42, %p43
    %s46 = sadd.s32 %s45, 1
    %p49 = scmp.eq.s32.totalorder %s11, 1
    %p50 = scmp.ne.s32.totalorder %s45, %s47
    %p51 = scmp.eq.s32.totalorder %s11, 0
    %p52 = por %p50, %p51
    %p53 = scmp.ne.s32.totalorder %s45, %s47
    %p54 = scmp.eq.s32.totalorder %s16, 1
    %p55 = por %p53, %p54
    %p56 = scmp.ne.s32.totalorder %s47, %s48
    %p57 = scmp.eq.s32.totalorder %s16, 0
    %p58 = por %p56, %p57
    %p59 = scmp.ne.s32.totalorder %s47, %s48
    %p60 = scmp.eq.s32.totalorder %s17, 1
    %p61 = por %p59, %p60
    %p63 = scmp.ne.s32.totalorder %s48, %s62
    %p64 = scmp.eq.s32.totalorder %s17, 0
    %p65 = por %p63, %p64
    %s67 = sadd.s32 %s66, 1
    %p70 = scmp.eq.s32.totalorder %s11, 1
    %p71 = scmp.ne.s32.totalorder %s66, %s68
    %p72 = scmp.eq.s32.totalorder %s11, 0
    %p73 = por %p71, %p72
    %p74 = scmp.ne.s32.totalorder %s66, %s68
    %p75 = scmp.eq.s32.totalorder %s16, 1
    %p76 = por %p74, %p75
    %p77 = scmp.ne.s32.totalorder %s68, %s69
    %p78 = scmp.eq.s32.totalorder %s16, 0
    %p79 = por %p77, %p78
    %p80 = scmp.ne.s32.totalorder %s68, %s69
    %p81 = scmp.eq.s32.totalorder %s17, 1
    %p82 = por %p80, %p81
    %p84 = scmp.ne.s32.totalorder %s69, %s83
    %p85 = scmp.eq.s32.totalorder %s17, 0
    %p86 = por %p84, %p85
    %s87 = ssub.s32 %s11, %s18
    %p88 = scmp.eq.s32.totalorder %s87, 0
    %s90 = sadd.s32 %s89, 1
    %s91 = scalar_select %p88, %s89, %s90
    %p94 = pneg %p88
    %p95 = scmp.eq.s32.totalorder %s11, 1
    %p96 = por %p94, %p95
    %p97 = scmp.ne.s32.totalorder %s89, %s92
    %p98 = scmp.eq.s32.totalorder %s11, 0
    %p99 = por %p97, %p98
    %p100 = scmp.ne.s32.totalorder %s89, %s92
    %p101 = scmp.eq.s32.totalorder %s16, 1
    %p102 = por %p100, %p101
    %p103 = scmp.ne.s32.totalorder %s92, %s93
    %p104 = scmp.eq.s32.totalorder %s16, 0
    %p105 = por %p103, %p104
    %p106 = scmp.ne.s32.totalorder %s92, %s93
    %p107 = scmp.eq.s32.totalorder %s17, 1
    %p108 = por %p106, %p107
    %p110 = scmp.ne.s32.totalorder %s93, %s109
    %p111 = scmp.eq.s32.totalorder %s17, 0
    %p112 = por %p110, %p111
    %s113 = ssub.s32 %s11, %s18
    %p114 = scmp.eq.s32.totalorder %s113, 0
    %s116 = sadd.s32 %s115, 1
    %s117 = scalar_select %p114, %s115, %s116
    %p120 = pneg %p114
    %p121 = scmp.eq.s32.totalorder %s11, 1
    %p122 = por %p120, %p121
    %p123 = scmp.ne.s32.totalorder %s115, %s118
    %p124 = scmp.eq.s32.totalorder %s11, 0
    %p125 = por %p123, %p124
    %p126 = scmp.ne.s32.totalorder %s115, %s118
    %p127 = scmp.eq.s32.totalorder %s16, 1
    %p128 = por %p126, %p127
    %p129 = scmp.ne.s32.totalorder %s118, %s119
    %p130 = scmp.eq.s32.totalorder %s16, 0
    %p131 = por %p129, %p130
    %p132 = scmp.ne.s32.totalorder %s118, %s119
    %p133 = scmp.eq.s32.totalorder %s17, 1
    %p134 = por %p132, %p133
    %p136 = scmp.ne.s32.totalorder %s119, %s135
    %p137 = scmp.eq.s32.totalorder %s17, 0
    %p138 = por %p136, %p137
    %p139 = scmp.le.s32.totalorder 1, %s11
    %p140 = scmp.lt.s32.totalorder %s11, 3
    %p141 = pnand %p139, %p140
    %p142 = pneg %p141
    // Predicated region
    $region9: #{unet_innermost_forward.1} parent=5 // pred_check
      _
    $region10: #{unet_innermost_forward.1} parent=5 // pred_check_branch
      %144 = sbr.rel (%p141) target = $region12
    $region11: #{unet_innermost_forward.1} parent=5 // pred_region
      %s145 = ssub.s32 %s11, 1
      // Predicated region
      $region13: #{unet_innermost_forward.1} parent=11 // pred_check
        %p146 = pneg %p58
      $region14: #{unet_innermost_forward.1} parent=11 // pred_check_branch
        %148 = sbr.rel (%p146) target = $region16
      $region15: #{unet_innermost_forward.1} parent=11 // pred_region
        _
      $region16: #{unet_innermost_forward.1} parent=11 // pred_fallthru
        _
      // Predicated region
      $region17: #{unet_innermost_forward.1} parent=11 // pred_check
        %p149 = pneg %p79
      $region18: #{unet_innermost_forward.1} parent=11 // pred_check_branch
        %151 = sbr.rel (%p149) target = $region20
      $region19: #{unet_innermost_forward.1} parent=11 // pred_region
        _
      $region20: #{unet_innermost_forward.1} parent=11 // pred_fallthru
        _
    $region12: #{unet_innermost_forward.1} parent=5 // pred_fallthru
      _
    %p152 = scmp.lt.s32.totalorder %s11, 2
    // Predicated region
    $region21: #{unet_innermost_forward.1} parent=5 // pred_check
      %p153 = pneg %p152
    $region22: #{unet_innermost_forward.1} parent=5 // pred_check_branch
      %155 = sbr.rel (%p153) target = $region24
    $region23: #{unet_innermost_forward.1} parent=5 // pred_region
      // Predicated region
      $region25: #{unet_innermost_forward.1} parent=23 // pred_check
        %p156 = pneg %p31
      $region26: #{unet_innermost_forward.1} parent=23 // pred_check_branch
        %158 = sbr.rel (%p156) target = $region28
      $region27: #{unet_innermost_forward.1} parent=23 // pred_region
        %p159 = scmp.lt.s32.totalorder %s11, 1
        %s160 = scalar_select %p159, %s11, 1
        %s161 = smul.addr %s160, 18
        %s162 = smul.addr %s161, 4
        %s163 = scalar_lea.vmem %s0, %s162
      $region28: #{unet_innermost_forward.1} parent=23 // pred_fallthru
        _
    $region24: #{unet_innermost_forward.1} parent=5 // pred_fallthru
      _
    %p164 = scmp.le.s32.totalorder 1, %s11
    %p165 = scmp.lt.s32.totalorder %s11, 3
    %p166 = pnand %p164, %p165
    %p167 = pneg %p166
    // Predicated region
    $region29: #{unet_innermost_forward.1} parent=5 // pred_check
      _
    $region30: #{unet_innermost_forward.1} parent=5 // pred_check_branch
      %169 = sbr.rel (%p166) target = $region32
    $region31: #{unet_innermost_forward.1} parent=5 // pred_region
      %s170 = ssub.s32 %s11, 1
      %p171 = scmp.lt.s32.totalorder %s16, 1
      %s172 = scalar_select %p171, %s16, 1
      %s173 = smul.addr %s172, 18
      %s174 = smul.addr %s173, 4
      %s175 = scalar_lea.vmem %s0, %s174
      %p176 = pneg %p37
      %p177 = pneg %p34
      %p178 = pneg %p58
      %p179 = pneg %p55
      %p180 = pneg %p79
      %p181 = pneg %p76
      %p182 = pneg %p105
      %p183 = pneg %p102
      %p184 = scmp.lt.s32.totalorder %s16, 1
      %s185 = scalar_select %p184, %s16, 1
      %s186 = smul.addr %s185, 32
      %s187 = smul.addr %s186, 4
      %s188 = scalar_lea.vmem %s3, %s187
      %p189 = pneg %p131
      %p190 = pneg %p128
      %p191 = scmp.lt.s32.totalorder %s16, 1
      %s192 = scalar_select %p191, %s16, 1
      %s193 = smul.addr %s192, 2
      %s194 = scalar_lea.vmem %s4, %s193
      %p195 = scmp.lt.s32.totalorder %s16, 1
      %s196 = scalar_select %p195, %s16, 1
      %s197 = smul.addr %s196, 18
      %s198 = smul.addr %s197, 4
      %s199 = scalar_lea.vmem %s0, %s198
      %p200 = scmp.lt.s32.totalorder %s16, 1
      %s201 = scalar_select %p200, %s16, 1
      %s202 = smul.addr %s201, 32
      %s203 = smul.addr %s202, 4
      %s204 = scalar_lea.vmem %s3, %s203
      %p205 = scmp.lt.s32.totalorder %s16, 1
      %s206 = scalar_select %p205, %s16, 1
      %s207 = smul.addr %s206, 2
      %s208 = scalar_lea.vmem %s4, %s207
      %v210 = vld [vmem:[%s199] sm:$0xf]
      %v211 = vld [vmem:[%s199 + $0x4] sm:$0x1]
      %v212 = vld [vmem:[%s199 + $0x8] sm:$0xf]
      %v213 = vld [vmem:[%s199 + $0xc] sm:$0x1]
      %v214 = vld [vmem:[%s199 + $0x10] sm:$0xf]
      %v215 = vld [vmem:[%s199 + $0x14] sm:$0x1]
      %v216 = vld [vmem:[%s199 + $0x18] sm:$0xf]
      %v217 = vld [vmem:[%s199 + $0x1c] sm:$0x1]
      %v218 = vld [vmem:[%s199 + $0x20] sm:$0xf]
      %v219 = vld [vmem:[%s199 + $0x24] sm:$0x1]
      %v220 = vld [vmem:[%s199 + $0x28] sm:$0xf]
      %v221 = vld [vmem:[%s199 + $0x2c] sm:$0x1]
      %v222 = vld [vmem:[%s199 + $0x30] sm:$0xf]
      %v223 = vld [vmem:[%s199 + $0x34] sm:$0x1]
      %v224 = vld [vmem:[%s199 + $0x38] sm:$0xf]
      %v225 = vld [vmem:[%s199 + $0x3c] sm:$0x1]
      %v226 = vld [vmem:[%s199 + $0x40] sm:$0xf]
      %v227 = vld [vmem:[%s199 + $0x44] sm:$0x1]
      %v228 = vunpack.c.l.bf16 %v210
      %v229 = vunpack.c.l.bf16 %v211
      %v230 = vunpack.c.l.bf16 %v212
      %v231 = vunpack.c.l.bf16 %v213
      %v232 = vunpack.c.l.bf16 %v214
      %v233 = vunpack.c.l.bf16 %v215
      %v234 = vunpack.c.l.bf16 %v216
      %v235 = vunpack.c.l.bf16 %v217
      %v236 = vunpack.c.l.bf16 %v218
      %v237 = vunpack.c.l.bf16 %v219
      %v238 = vunpack.c.l.bf16 %v220
      %v239 = vunpack.c.l.bf16 %v221
      %v240 = vunpack.c.l.bf16 %v222
      %v241 = vunpack.c.l.bf16 %v223
      %v242 = vunpack.c.l.bf16 %v224
      %v243 = vunpack.c.l.bf16 %v225
      %v244 = vunpack.c.l.bf16 %v226
      %v245 = vunpack.c.l.bf16 %v227
      %v246 = vpack.c.bf16 %v230, %v228
      %v247 = vpack.c.bf16 %v234, %v232
      %v248 = vpack.c.bf16 %v238, %v236
      %v249 = vpack.c.bf16 %v242, %v240
      %v250 = vld [vmem:[%s1] sm:$0xf]
      %v251 = vld [vmem:[%s1 + $0x4] sm:$0xf]
      %vm268 = vcmask 1046528
      %v269 = vrot.slane %v228, 1
      %v270 = vrot.slane %v229, 1
      %v271 = vsel %vm268, %v269, %v270
      %v272 = vrot.slane %v230, 1
      %v273 = vrot.slane %v231, 1
      %v274 = vsel %vm268, %v272, %v273
      %v275 = vrot.slane %v232, 1
      %v276 = vrot.slane %v233, 1
      %v277 = vsel %vm268, %v275, %v276
      %v278 = vrot.slane %v234, 1
      %v279 = vrot.slane %v235, 1
      %v280 = vsel %vm268, %v278, %v279
      %v281 = vrot.slane %v236, 1
      %v282 = vrot.slane %v237, 1
      %v283 = vsel %vm268, %v281, %v282
      %v284 = vrot.slane %v238, 1
      %v285 = vrot.slane %v239, 1
      %v286 = vsel %vm268, %v284, %v285
      %v287 = vrot.slane %v240, 1
      %v288 = vrot.slane %v241, 1
      %v289 = vsel %vm268, %v287, %v288
      %v290 = vrot.slane %v242, 1
      %v291 = vrot.slane %v243, 1
      %v292 = vsel %vm268, %v290, %v291
      %v301 = vpack.c.bf16 %v274, %v271
      %v302 = vpack.c.bf16 %v280, %v277
      %v303 = vpack.c.bf16 %v286, %v283
      %v304 = vpack.c.bf16 %v292, %v289
      %s305 = scalar_lea.vmem %s1, 8
      %v306 = vld [vmem:[%s305] sm:$0xf]
      %v307 = vld [vmem:[%s305 + $0x4] sm:$0xf]
      %v310 = vunpack.c.l.b16 %v306
      %v311 = vunpack.c.l.b16 %v307
      %v312 = vpack.c.b16 %v311, %v310
      %vm314 = vcmask 130048
      %v316 = vsel %vm314, %v301, 0
      %v319 = vsel %vm314, %v302, 0
      %v322 = vsel %vm314, %v303, 0
      %v325 = vsel %vm314, %v304, 0
      %327 = vmatpush.bf16.msra.mxu0 0
      %328 = vmatpush.bf16.msra.mxu0 0
      %329 = vmatpush.bf16.msra.mxu0 0
      %330 = vmatpush.bf16.msra.mxu0 0
      %331 = vmatpush.bf16.msra.mxu0 0
      %332 = vmatpush.bf16.msra.mxu0 0
      %333 = vmatpush.bf16.msra.mxu0 0
      %334 = vmatpush.bf16.msra.mxu0 %v312
      %335 = vmatmul.bf16.gmra.mxu0 %v316
      %v336 = vpop.f32.mrf.mxu0
      %v337 = vadd.f32 0.0, %v336
      %v338 = vpop.f32.mrf.mxu0
      %v339 = vadd.f32 0.0, %v338
      %340 = vmatmul.bf16.gmra.mxu0 %v319
      %v341 = vpop.f32.mrf.mxu0
      %v342 = vadd.f32 0.0, %v341
      %v343 = vpop.f32.mrf.mxu0
      %v344 = vadd.f32 0.0, %v343
      %345 = vmatmul.bf16.gmra.mxu0 %v322
      %v346 = vpop.f32.mrf.mxu0
      %v347 = vadd.f32 0.0, %v346
      %v348 = vpop.f32.mrf.mxu0
      %v349 = vadd.f32 0.0, %v348
      %350 = vmatmul.bf16.gmra.mxu0 %v325
      %v351 = vpop.f32.mrf.mxu0
      %v352 = vadd.f32 0.0, %v351
      %v353 = vpop.f32.mrf.mxu0
      %v354 = vadd.f32 0.0, %v353
      %355 = vdwg.mxu0
      %v358 = vunpack.c.l.b16 %v250
      %v359 = vunpack.c.l.b16 %v251
      %v360 = vpack.c.b16 %v359, %v358
      %v363 = vsel %vm314, %v246, 0
      %v366 = vsel %vm314, %v247, 0
      %v369 = vsel %vm314, %v248, 0
      %v372 = vsel %vm314, %v249, 0
      %374 = vmatpush.bf16.msra.mxu0 0
      %375 = vmatpush.bf16.msra.mxu0 0
      %376 = vmatpush.bf16.msra.mxu0 0
      %377 = vmatpush.bf16.msra.mxu0 0
      %378 = vmatpush.bf16.msra.mxu0 0
      %379 = vmatpush.bf16.msra.mxu0 0
      %380 = vmatpush.bf16.msra.mxu0 0
      %381 = vmatpush.bf16.msra.mxu0 %v360
      %382 = vmatmul.bf16.gmra.mxu0 %v363
      %v383 = vpop.f32.mrf.mxu0
      %v384 = vadd.f32 %v337, %v383
      %v385 = vpop.f32.mrf.mxu0
      %v386 = vadd.f32 %v339, %v385
      %387 = vmatmul.bf16.gmra.mxu0 %v366
      %v388 = vpop.f32.mrf.mxu0
      %v389 = vadd.f32 %v342, %v388
      %v390 = vpop.f32.mrf.mxu0
      %v391 = vadd.f32 %v344, %v390
      %392 = vmatmul.bf16.gmra.mxu0 %v369
      %v393 = vpop.f32.mrf.mxu0
      %v394 = vadd.f32 %v347, %v393
      %v395 = vpop.f32.mrf.mxu0
      %v396 = vadd.f32 %v349, %v395
      %397 = vmatmul.bf16.gmra.mxu0 %v372
      %v398 = vpop.f32.mrf.mxu0
      %v399 = vadd.f32 %v352, %v398
      %v400 = vpop.f32.mrf.mxu0
      %v401 = vadd.f32 %v354, %v400
      %402 = vdwg.mxu0
      %v403 = vpack.c.bf16 %v232, %v230
      %v404 = vpack.c.bf16 %v236, %v234
      %v405 = vpack.c.bf16 %v240, %v238
      %v406 = vpack.c.bf16 %v244, %v242
      %s407 = scalar_lea.vmem %s1, 16
      %v408 = vld [vmem:[%s407] sm:$0xf]
      %v409 = vld [vmem:[%s407 + $0x4] sm:$0xf]
      %v412 = vunpack.c.l.b16 %v408
      %v413 = vunpack.c.l.b16 %v409
      %v414 = vpack.c.b16 %v413, %v412
      %v417 = vsel %vm314, %v403, 0
      %v420 = vsel %vm314, %v404, 0
      %v423 = vsel %vm314, %v405, 0
      %v426 = vsel %vm314, %v406, 0
      %428 = vmatpush.bf16.msra.mxu0 0
      %429 = vmatpush.bf16.msra.mxu0 0
      %430 = vmatpush.bf16.msra.mxu0 0
      %431 = vmatpush.bf16.msra.mxu0 0
      %432 = vmatpush.bf16.msra.mxu0 0
      %433 = vmatpush.bf16.msra.mxu0 0
      %434 = vmatpush.bf16.msra.mxu0 0
      %435 = vmatpush.bf16.msra.mxu0 %v414
      %436 = vmatmul.bf16.gmra.mxu0 %v417
      %v437 = vpop.f32.mrf.mxu0
      %v438 = vadd.f32 0.0, %v437
      %v439 = vpop.f32.mrf.mxu0
      %v440 = vadd.f32 0.0, %v439
      %441 = vmatmul.bf16.gmra.mxu0 %v420
      %v442 = vpop.f32.mrf.mxu0
      %v443 = vadd.f32 0.0, %v442
      %v444 = vpop.f32.mrf.mxu0
      %v445 = vadd.f32 0.0, %v444
      %446 = vmatmul.bf16.gmra.mxu0 %v423
      %v447 = vpop.f32.mrf.mxu0
      %v448 = vadd.f32 0.0, %v447
      %v449 = vpop.f32.mrf.mxu0
      %v450 = vadd.f32 0.0, %v449
      %451 = vmatmul.bf16.gmra.mxu0 %v426
      %v452 = vpop.f32.mrf.mxu0
      %v453 = vadd.f32 0.0, %v452
      %v454 = vpop.f32.mrf.mxu0
      %v455 = vadd.f32 0.0, %v454
      %456 = vdwg.mxu0
      %v457 = vadd.f32 %v384, %v438
      %v458 = vadd.f32 %v386, %v440
      %v459 = vadd.f32 %v389, %v443
      %v460 = vadd.f32 %v391, %v445
      %v461 = vadd.f32 %v394, %v448
      %v462 = vadd.f32 %v396, %v450
      %v463 = vadd.f32 %v399, %v453
      %v464 = vadd.f32 %v401, %v455
      %v467 = vrot.slane %v244, 1
      %v468 = vrot.slane %v245, 1
      %v469 = vsel %vm268, %v467, %v468
      %v471 = vpack.c.bf16 %v277, %v274
      %v472 = vpack.c.bf16 %v283, %v280
      %v473 = vpack.c.bf16 %v289, %v286
      %v474 = vpack.c.bf16 %v469, %v292
      %s475 = scalar_lea.vmem %s1, 24
      %v476 = vld [vmem:[%s475] sm:$0xf]
      %v477 = vld [vmem:[%s475 + $0x4] sm:$0xf]
      %v480 = vunpack.c.l.b16 %v476
      %v481 = vunpack.c.l.b16 %v477
      %v482 = vpack.c.b16 %v481, %v480
      %v485 = vsel %vm314, %v471, 0
      %v488 = vsel %vm314, %v472, 0
      %v491 = vsel %vm314, %v473, 0
      %v494 = vsel %vm314, %v474, 0
      %496 = vmatpush.bf16.msra.mxu0 0
      %497 = vmatpush.bf16.msra.mxu0 0
      %498 = vmatpush.bf16.msra.mxu0 0
      %499 = vmatpush.bf16.msra.mxu0 0
      %500 = vmatpush.bf16.msra.mxu0 0
      %501 = vmatpush.bf16.msra.mxu0 0
      %502 = vmatpush.bf16.msra.mxu0 0
      %503 = vmatpush.bf16.msra.mxu0 %v482
      %504 = vmatmul.bf16.gmra.mxu0 %v485
      %v505 = vpop.f32.mrf.mxu0
      %v506 = vadd.f32 0.0, %v505
      %v507 = vpop.f32.mrf.mxu0
      %v508 = vadd.f32 0.0, %v507
      %509 = vmatmul.bf16.gmra.mxu0 %v488
      %v510 = vpop.f32.mrf.mxu0
      %v511 = vadd.f32 0.0, %v510
      %v512 = vpop.f32.mrf.mxu0
      %v513 = vadd.f32 0.0, %v512
      %514 = vmatmul.bf16.gmra.mxu0 %v491
      %v515 = vpop.f32.mrf.mxu0
      %v516 = vadd.f32 0.0, %v515
      %v517 = vpop.f32.mrf.mxu0
      %v518 = vadd.f32 0.0, %v517
      %519 = vmatmul.bf16.gmra.mxu0 %v494
      %v520 = vpop.f32.mrf.mxu0
      %v521 = vadd.f32 0.0, %v520
      %v522 = vpop.f32.mrf.mxu0
      %v523 = vadd.f32 0.0, %v522
      %524 = vdwg.mxu0
      %v525 = vadd.f32 %v457, %v506
      %v526 = vadd.f32 %v458, %v508
      %v527 = vadd.f32 %v459, %v511
      %v528 = vadd.f32 %v460, %v513
      %v529 = vadd.f32 %v461, %v516
      %v530 = vadd.f32 %v462, %v518
      %v531 = vadd.f32 %v463, %v521
      %v532 = vadd.f32 %v464, %v523
      %533 = vst [vmem:[#allocation2] sm:$0xff] 0.0
      %534 = vst [vmem:[#allocation2 + $0x8] sm:$0x3] 0.0
      %s535 = scalar_lea.vmem [#allocation2], 144
      %536 = vst [vmem:[%s535] sm:$0xff] 0.0
      %537 = vst [vmem:[%s535 + $0x8] sm:$0x3] 0.0
      %538 = vst [vmem:[#allocation2] sm:$0x1] 0.0
      %539 = vst [vmem:[#allocation2 + $0x10] sm:$0x1] 0.0
      %540 = vst [vmem:[#allocation2 + $0x20] sm:$0x1] 0.0
      %541 = vst [vmem:[#allocation2 + $0x30] sm:$0x1] 0.0
      %542 = vst [vmem:[#allocation2 + $0x40] sm:$0x1] 0.0
      %543 = vst [vmem:[#allocation2 + $0x50] sm:$0x1] 0.0
      %544 = vst [vmem:[#allocation2 + $0x60] sm:$0x1] 0.0
      %545 = vst [vmem:[#allocation2 + $0x70] sm:$0x1] 0.0
      %546 = vst [vmem:[#allocation2 + $0x80] sm:$0x1] 0.0
      %547 = vst [vmem:[#allocation2 + $0x90] sm:$0x1] 0.0
      %548 = vst [vmem:[#allocation2 + $0x9] sm:$0x1] 0.0
      %549 = vst [vmem:[#allocation2 + $0x19] sm:$0x1] 0.0
      %550 = vst [vmem:[#allocation2 + $0x29] sm:$0x1] 0.0
      %551 = vst [vmem:[#allocation2 + $0x39] sm:$0x1] 0.0
      %552 = vst [vmem:[#allocation2 + $0x49] sm:$0x1] 0.0
      %553 = vst [vmem:[#allocation2 + $0x59] sm:$0x1] 0.0
      %554 = vst [vmem:[#allocation2 + $0x69] sm:$0x1] 0.0
      %555 = vst [vmem:[#allocation2 + $0x79] sm:$0x1] 0.0
      %556 = vst [vmem:[#allocation2 + $0x89] sm:$0x1] 0.0
      %557 = vst [vmem:[#allocation2 + $0x99] sm:$0x1] 0.0
      %v558 = vmax.f32 %v525, 0.0
      %v559 = vmax.f32 %v526, 0.0
      %v560 = vmax.f32 %v527, 0.0
      %v561 = vmax.f32 %v528, 0.0
      %v562 = vmax.f32 %v529, 0.0
      %v563 = vmax.f32 %v530, 0.0
      %v564 = vmax.f32 %v531, 0.0
      %v565 = vmax.f32 %v532, 0.0
      %s566 = scalar_lea.vmem [#allocation2], 16
      %567 = vst [vmem:[%s566 + $0x1] sm:$0xff] %v558
      %568 = vst [vmem:[%s566 + $0x11] sm:$0xff] %v559
      %569 = vst [vmem:[%s566 + $0x21] sm:$0xff] %v560
      %570 = vst [vmem:[%s566 + $0x31] sm:$0xff] %v561
      %571 = vst [vmem:[%s566 + $0x41] sm:$0xff] %v562
      %572 = vst [vmem:[%s566 + $0x51] sm:$0xff] %v563
      %573 = vst [vmem:[%s566 + $0x61] sm:$0xff] %v564
      %574 = vst [vmem:[%s566 + $0x71] sm:$0xff] %v565
      %v575 = vld [vmem:[#allocation2] sm:$0xff]
      %v576 = vld [vmem:[#allocation2 + $0x10] sm:$0xff]
      %v577 = vld [vmem:[#allocation2 + $0x20] sm:$0xff]
      %v578 = vld [vmem:[#allocation2 + $0x30] sm:$0xff]
      %v579 = vld [vmem:[#allocation2 + $0x40] sm:$0xff]
      %v580 = vld [vmem:[#allocation2 + $0x50] sm:$0xff]
      %v581 = vld [vmem:[#allocation2 + $0x60] sm:$0xff]
      %v582 = vld [vmem:[#allocation2 + $0x70] sm:$0xff]
      %v583 = vpack.c.bf16 %v575, %v575
      %v584 = vpack.c.bf16 %v576, %v576
      %v585 = vpack.c.bf16 %v577, %v577
      %v586 = vpack.c.bf16 %v578, %v578
      %v587 = vpack.c.bf16 %v579, %v579
      %v588 = vpack.c.bf16 %v580, %v580
      %v589 = vpack.c.bf16 %v581, %v581
      %v590 = vpack.c.bf16 %v582, %v582
      %v591 = vld [vmem:[#allocation2 + $0x1] sm:$0xff]
      %v592 = vld [vmem:[#allocation2 + $0x11] sm:$0xff]
      %v593 = vld [vmem:[#allocation2 + $0x21] sm:$0xff]
      %v594 = vld [vmem:[#allocation2 + $0x31] sm:$0xff]
      %v595 = vld [vmem:[#allocation2 + $0x41] sm:$0xff]
      %v596 = vld [vmem:[#allocation2 + $0x51] sm:$0xff]
      %v597 = vld [vmem:[#allocation2 + $0x61] sm:$0xff]
      %v598 = vld [vmem:[#allocation2 + $0x71] sm:$0xff]
      %v599 = vpack.c.bf16 %v591, %v591
      %v600 = vpack.c.bf16 %v592, %v592
      %v601 = vpack.c.bf16 %v593, %v593
      %v602 = vpack.c.bf16 %v594, %v594
      %v603 = vpack.c.bf16 %v595, %v595
      %v604 = vpack.c.bf16 %v596, %v596
      %v605 = vpack.c.bf16 %v597, %v597
      %v606 = vpack.c.bf16 %v598, %v598
      %v607 = vld [vmem:[%s566] sm:$0xff]
      %v608 = vld [vmem:[%s566 + $0x10] sm:$0xff]
      %v609 = vld [vmem:[%s566 + $0x20] sm:$0xff]
      %v610 = vld [vmem:[%s566 + $0x30] sm:$0xff]
      %v611 = vld [vmem:[%s566 + $0x40] sm:$0xff]
      %v612 = vld [vmem:[%s566 + $0x50] sm:$0xff]
      %v613 = vld [vmem:[%s566 + $0x60] sm:$0xff]
      %v614 = vld [vmem:[%s566 + $0x70] sm:$0xff]
      %v615 = vpack.c.bf16 %v607, %v607
      %v616 = vpack.c.bf16 %v608, %v608
      %v617 = vpack.c.bf16 %v609, %v609
      %v618 = vpack.c.bf16 %v610, %v610
      %v619 = vpack.c.bf16 %v611, %v611
      %v620 = vpack.c.bf16 %v612, %v612
      %v621 = vpack.c.bf16 %v613, %v613
      %v622 = vpack.c.bf16 %v614, %v614
      %v623 = vld [vmem:[%s566 + $0x1] sm:$0xff]
      %v624 = vld [vmem:[%s566 + $0x11] sm:$0xff]
      %v625 = vld [vmem:[%s566 + $0x21] sm:$0xff]
      %v626 = vld [vmem:[%s566 + $0x31] sm:$0xff]
      %v627 = vld [vmem:[%s566 + $0x41] sm:$0xff]
      %v628 = vld [vmem:[%s566 + $0x51] sm:$0xff]
      %v629 = vld [vmem:[%s566 + $0x61] sm:$0xff]
      %v630 = vld [vmem:[%s566 + $0x71] sm:$0xff]
      %v631 = vpack.c.bf16 %v623, %v623
      %v632 = vpack.c.bf16 %v624, %v624
      %v633 = vpack.c.bf16 %v625, %v625
      %v634 = vpack.c.bf16 %v626, %v626
      %v635 = vpack.c.bf16 %v627, %v627
      %v636 = vpack.c.bf16 %v628, %v628
      %v637 = vpack.c.bf16 %v629, %v629
      %v638 = vpack.c.bf16 %v630, %v630
      %v647 = vunpack.c.l.b16 %v583
      %v648 = vunpack.c.l.b16 %v584
      %v649 = vunpack.c.l.b16 %v585
      %v650 = vunpack.c.l.b16 %v586
      %v651 = vunpack.c.l.b16 %v587
      %v652 = vunpack.c.l.b16 %v588
      %v653 = vunpack.c.l.b16 %v589
      %v654 = vunpack.c.l.b16 %v590
      %v655 = vpack.c.b16 %v648, %v647
      %v656 = vpack.c.b16 %v650, %v649
      %v657 = vpack.c.b16 %v652, %v651
      %v658 = vpack.c.b16 %v654, %v653
      %v671 = vunpack.c.l.b16 %v599
      %v672 = vunpack.c.l.b16 %v600
      %v673 = vunpack.c.l.b16 %v601
      %v674 = vunpack.c.l.b16 %v602
      %v675 = vunpack.c.l.b16 %v603
      %v676 = vunpack.c.l.b16 %v604
      %v677 = vunpack.c.l.b16 %v605
      %v678 = vunpack.c.l.b16 %v606
      %v679 = vpack.c.b16 %v672, %v671
      %v680 = vpack.c.b16 %v674, %v673
      %v681 = vpack.c.b16 %v676, %v675
      %v682 = vpack.c.b16 %v678, %v677
      %v695 = vunpack.c.l.b16 %v615
      %v696 = vunpack.c.l.b16 %v616
      %v697 = vunpack.c.l.b16 %v617
      %v698 = vunpack.c.l.b16 %v618
      %v699 = vunpack.c.l.b16 %v619
      %v700 = vunpack.c.l.b16 %v620
      %v701 = vunpack.c.l.b16 %v621
      %v702 = vunpack.c.l.b16 %v622
      %v703 = vpack.c.b16 %v696, %v695
      %v704 = vpack.c.b16 %v698, %v697
      %v705 = vpack.c.b16 %v700, %v699
      %v706 = vpack.c.b16 %v702, %v701
      %v719 = vunpack.c.l.b16 %v631
      %v720 = vunpack.c.l.b16 %v632
      %v721 = vunpack.c.l.b16 %v633
      %v722 = vunpack.c.l.b16 %v634
      %v723 = vunpack.c.l.b16 %v635
      %v724 = vunpack.c.l.b16 %v636
      %v725 = vunpack.c.l.b16 %v637
      %v726 = vunpack.c.l.b16 %v638
      %v727 = vpack.c.b16 %v720, %v719
      %v728 = vpack.c.b16 %v722, %v721
      %v729 = vpack.c.b16 %v724, %v723
      %v730 = vpack.c.b16 %v726, %v725
      %v735 = vld [vmem:[%s2] sm:$0xf]
      %v736 = vld [vmem:[%s2 + $0x4] sm:$0xf]
      %v737 = vld [vmem:[%s2 + $0x8] sm:$0xf]
      %v738 = vld [vmem:[%s2 + $0xc] sm:$0xf]
      %v739 = vld [vmem:[%s2 + $0x10] sm:$0xf]
      %v740 = vld [vmem:[%s2 + $0x14] sm:$0xf]
      %v741 = vld [vmem:[%s2 + $0x18] sm:$0xf]
      %v742 = vld [vmem:[%s2 + $0x1c] sm:$0xf]
      %v743 = vld [vmem:[%s2 + $0x20] sm:$0xf]
      %v744 = vld [vmem:[%s2 + $0x24] sm:$0xf]
      %v745 = vld [vmem:[%s2 + $0x28] sm:$0xf]
      %v746 = vld [vmem:[%s2 + $0x2c] sm:$0xf]
      %v747 = vld [vmem:[%s2 + $0x30] sm:$0xf]
      %v748 = vld [vmem:[%s2 + $0x34] sm:$0xf]
      %v749 = vld [vmem:[%s2 + $0x38] sm:$0xf]
      %v750 = vld [vmem:[%s2 + $0x3c] sm:$0xf]
      %v751 = vld [vmem:[%s2 + $0x40] sm:$0xf]
      %v752 = vld [vmem:[%s2 + $0x44] sm:$0xf]
      %v753 = vld [vmem:[%s2 + $0x48] sm:$0xf]
      %v754 = vld [vmem:[%s2 + $0x4c] sm:$0xf]
      %v755 = vld [vmem:[%s2 + $0x50] sm:$0xf]
      %v756 = vld [vmem:[%s2 + $0x54] sm:$0xf]
      %v757 = vld [vmem:[%s2 + $0x58] sm:$0xf]
      %v758 = vld [vmem:[%s2 + $0x5c] sm:$0xf]
      %v759 = vld [vmem:[%s2 + $0x60] sm:$0xf]
      %v760 = vld [vmem:[%s2 + $0x64] sm:$0xf]
      %v761 = vld [vmem:[%s2 + $0x68] sm:$0xf]
      %v762 = vld [vmem:[%s2 + $0x6c] sm:$0xf]
      %v763 = vld [vmem:[%s2 + $0x70] sm:$0xf]
      %v764 = vld [vmem:[%s2 + $0x74] sm:$0xf]
      %v765 = vld [vmem:[%s2 + $0x78] sm:$0xf]
      %v766 = vld [vmem:[%s2 + $0x7c] sm:$0xf]
      %v767 = vld [vmem:[%s2 + $0x80] sm:$0xf]
      %v768 = vld [vmem:[%s2 + $0x84] sm:$0xf]
      %v769 = vld [vmem:[%s2 + $0x88] sm:$0xf]
      %v770 = vld [vmem:[%s2 + $0x8c] sm:$0xf]
      %v771 = vld [vmem:[%s2 + $0x90] sm:$0xf]
      %v772 = vld [vmem:[%s2 + $0x94] sm:$0xf]
      %v773 = vld [vmem:[%s2 + $0x98] sm:$0xf]
      %v774 = vld [vmem:[%s2 + $0x9c] sm:$0xf]
      %v775 = vld [vmem:[%s2 + $0xa0] sm:$0xf]
      %v776 = vld [vmem:[%s2 + $0xa4] sm:$0xf]
      %v777 = vld [vmem:[%s2 + $0xa8] sm:$0xf]
      %v778 = vld [vmem:[%s2 + $0xac] sm:$0xf]
      %v779 = vld [vmem:[%s2 + $0xb0] sm:$0xf]
      %v780 = vld [vmem:[%s2 + $0xb4] sm:$0xf]
      %v781 = vld [vmem:[%s2 + $0xb8] sm:$0xf]
      %v782 = vld [vmem:[%s2 + $0xbc] sm:$0xf]
      %v783 = vld [vmem:[%s2 + $0xc0] sm:$0xf]
      %v784 = vld [vmem:[%s2 + $0xc4] sm:$0xf]
      %v785 = vld [vmem:[%s2 + $0xc8] sm:$0xf]
      %v786 = vld [vmem:[%s2 + $0xcc] sm:$0xf]
      %v787 = vld [vmem:[%s2 + $0xd0] sm:$0xf]
      %v788 = vld [vmem:[%s2 + $0xd4] sm:$0xf]
      %v789 = vld [vmem:[%s2 + $0xd8] sm:$0xf]
      %v790 = vld [vmem:[%s2 + $0xdc] sm:$0xf]
      %v791 = vld [vmem:[%s2 + $0xe0] sm:$0xf]
      %v792 = vld [vmem:[%s2 + $0xe4] sm:$0xf]
      %v793 = vld [vmem:[%s2 + $0xe8] sm:$0xf]
      %v794 = vld [vmem:[%s2 + $0xec] sm:$0xf]
      %v795 = vld [vmem:[%s2 + $0xf0] sm:$0xf]
      %v796 = vld [vmem:[%s2 + $0xf4] sm:$0xf]
      %v797 = vld [vmem:[%s2 + $0xf8] sm:$0xf]
      %v798 = vld [vmem:[%s2 + $0xfc] sm:$0xf]
      %v863 = vunpack.c.l.b16 %v735
      %v864 = vunpack.c.l.b16 %v736
      %v865 = vunpack.c.l.b16 %v737
      %v866 = vunpack.c.l.b16 %v738
      %v867 = vunpack.c.l.b16 %v739
      %v868 = vunpack.c.l.b16 %v740
      %v869 = vunpack.c.l.b16 %v741
      %v870 = vunpack.c.l.b16 %v742
      %v871 = vunpack.c.l.b16 %v743
      %v872 = vunpack.c.l.b16 %v744
      %v873 = vunpack.c.l.b16 %v745
      %v874 = vunpack.c.l.b16 %v746
      %v875 = vunpack.c.l.b16 %v747
      %v876 = vunpack.c.l.b16 %v748
      %v877 = vunpack.c.l.b16 %v749
      %v878 = vunpack.c.l.b16 %v750
      %v879 = vunpack.c.l.b16 %v751
      %v880 = vunpack.c.l.b16 %v752
      %v881 = vunpack.c.l.b16 %v753
      %v882 = vunpack.c.l.b16 %v754
      %v883 = vunpack.c.l.b16 %v755
      %v884 = vunpack.c.l.b16 %v756
      %v885 = vunpack.c.l.b16 %v757
      %v886 = vunpack.c.l.b16 %v758
      %v887 = vunpack.c.l.b16 %v759
      %v888 = vunpack.c.l.b16 %v760
      %v889 = vunpack.c.l.b16 %v761
      %v890 = vunpack.c.l.b16 %v762
      %v891 = vunpack.c.l.b16 %v763
      %v892 = vunpack.c.l.b16 %v764
      %v893 = vunpack.c.l.b16 %v765
      %v894 = vunpack.c.l.b16 %v766
      %v895 = vunpack.c.l.b16 %v767
      %v896 = vunpack.c.l.b16 %v768
      %v897 = vunpack.c.l.b16 %v769
      %v898 = vunpack.c.l.b16 %v770
      %v899 = vunpack.c.l.b16 %v771
      %v900 = vunpack.c.l.b16 %v772
      %v901 = vunpack.c.l.b16 %v773
      %v902 = vunpack.c.l.b16 %v774
      %v903 = vunpack.c.l.b16 %v775
      %v904 = vunpack.c.l.b16 %v776
      %v905 = vunpack.c.l.b16 %v777
      %v906 = vunpack.c.l.b16 %v778
      %v907 = vunpack.c.l.b16 %v779
      %v908 = vunpack.c.l.b16 %v780
      %v909 = vunpack.c.l.b16 %v781
      %v910 = vunpack.c.l.b16 %v782
      %v911 = vunpack.c.l.b16 %v783
      %v912 = vunpack.c.l.b16 %v784
      %v913 = vunpack.c.l.b16 %v785
      %v914 = vunpack.c.l.b16 %v786
      %v915 = vunpack.c.l.b16 %v787
      %v916 = vunpack.c.l.b16 %v788
      %v917 = vunpack.c.l.b16 %v789
      %v918 = vunpack.c.l.b16 %v790
      %v919 = vunpack.c.l.b16 %v791
      %v920 = vunpack.c.l.b16 %v792
      %v921 = vunpack.c.l.b16 %v793
      %v922 = vunpack.c.l.b16 %v794
      %v923 = vunpack.c.l.b16 %v795
      %v924 = vunpack.c.l.b16 %v796
      %v925 = vunpack.c.l.b16 %v797
      %v926 = vunpack.c.l.b16 %v798
      %v927 = vpack.c.b16 %v864, %v863
      %v928 = vpack.c.b16 %v866, %v865
      %v929 = vpack.c.b16 %v868, %v867
      %v930 = vpack.c.b16 %v870, %v869
      %v931 = vpack.c.b16 %v872, %v871
      %v932 = vpack.c.b16 %v874, %v873
      %v933 = vpack.c.b16 %v876, %v875
      %v934 = vpack.c.b16 %v878, %v877
      %v935 = vpack.c.b16 %v880, %v879
      %v936 = vpack.c.b16 %v882, %v881
      %v937 = vpack.c.b16 %v884, %v883
      %v938 = vpack.c.b16 %v886, %v885
      %v939 = vpack.c.b16 %v888, %v887
      %v940 = vpack.c.b16 %v890, %v889
      %v941 = vpack.c.b16 %v892, %v891
      %v942 = vpack.c.b16 %v894, %v893
      %v943 = vpack.c.b16 %v896, %v895
      %v944 = vpack.c.b16 %v898, %v897
      %v945 = vpack.c.b16 %v900, %v899
      %v946 = vpack.c.b16 %v902, %v901
      %v947 = vpack.c.b16 %v904, %v903
      %v948 = vpack.c.b16 %v906, %v905
      %v949 = vpack.c.b16 %v908, %v907
      %v950 = vpack.c.b16 %v910, %v909
      %v951 = vpack.c.b16 %v912, %v911
      %v952 = vpack.c.b16 %v914, %v913
      %v953 = vpack.c.b16 %v916, %v915
      %v954 = vpack.c.b16 %v918, %v917
      %v955 = vpack.c.b16 %v920, %v919
      %v956 = vpack.c.b16 %v922, %v921
      %v957 = vpack.c.b16 %v924, %v923
      %v958 = vpack.c.b16 %v926, %v925
      %991 = vmatpush.bf16.msra.mxu0 %v934
      %992 = vmatpush.bf16.msra.mxu0 %v933
      %993 = vmatpush.bf16.msra.mxu0 %v932
      %994 = vmatpush.bf16.msra.mxu0 %v931
      %995 = vmatpush.bf16.msra.mxu0 %v930
      %996 = vmatpush.bf16.msra.mxu0 %v929
      %997 = vmatpush.bf16.msra.mxu0 %v928
      %998 = vmatpush.bf16.msra.mxu0 %v927
      %999 = vmatmul.bf16.gmra.mxu0 %v655
      %v1000 = vpop.f32.mrf.mxu0
      %v1001 = vadd.f32 0.0, %v1000
      %v1002 = vpop.f32.mrf.mxu0
      %v1003 = vadd.f32 0.0, %v1002
      %1004 = vmatmul.bf16.gmra.mxu0 %v656
      %v1005 = vpop.f32.mrf.mxu0
      %v1006 = vadd.f32 0.0, %v1005
      %v1007 = vpop.f32.mrf.mxu0
      %v1008 = vadd.f32 0.0, %v1007
      %1009 = vmatmul.bf16.gmra.mxu0 %v657
      %v1010 = vpop.f32.mrf.mxu0
      %v1011 = vadd.f32 0.0, %v1010
      %v1012 = vpop.f32.mrf.mxu0
      %v1013 = vadd.f32 0.0, %v1012
      %1014 = vmatmul.bf16.gmra.mxu0 %v658
      %v1015 = vpop.f32.mrf.mxu0
      %v1016 = vadd.f32 0.0, %v1015
      %v1017 = vpop.f32.mrf.mxu0
      %v1018 = vadd.f32 0.0, %v1017
      %1019 = vdwg.mxu0
      %1020 = vmatpush.bf16.msra.mxu0 %v942
      %1021 = vmatpush.bf16.msra.mxu0 %v941
      %1022 = vmatpush.bf16.msra.mxu0 %v940
      %1023 = vmatpush.bf16.msra.mxu0 %v939
      %1024 = vmatpush.bf16.msra.mxu0 %v938
      %1025 = vmatpush.bf16.msra.mxu0 %v937
      %1026 = vmatpush.bf16.msra.mxu0 %v936
      %1027 = vmatpush.bf16.msra.mxu0 %v935
      %1028 = vmatmul.bf16.gmra.mxu0 %v679
      %v1029 = vpop.f32.mrf.mxu0
      %v1030 = vadd.f32 %v1001, %v1029
      %v1031 = vpop.f32.mrf.mxu0
      %v1032 = vadd.f32 %v1003, %v1031
      %1033 = vmatmul.bf16.gmra.mxu0 %v680
      %v1034 = vpop.f32.mrf.mxu0
      %v1035 = vadd.f32 %v1006, %v1034
      %v1036 = vpop.f32.mrf.mxu0
      %v1037 = vadd.f32 %v1008, %v1036
      %1038 = vmatmul.bf16.gmra.mxu0 %v681
      %v1039 = vpop.f32.mrf.mxu0
      %v1040 = vadd.f32 %v1011, %v1039
      %v1041 = vpop.f32.mrf.mxu0
      %v1042 = vadd.f32 %v1013, %v1041
      %1043 = vmatmul.bf16.gmra.mxu0 %v682
      %v1044 = vpop.f32.mrf.mxu0
      %v1045 = vadd.f32 %v1016, %v1044
      %v1046 = vpop.f32.mrf.mxu0
      %v1047 = vadd.f32 %v1018, %v1046
      %1048 = vdwg.mxu0
      %1049 = vmatpush.bf16.msra.mxu0 %v950
      %1050 = vmatpush.bf16.msra.mxu0 %v949
      %1051 = vmatpush.bf16.msra.mxu0 %v948
      %1052 = vmatpush.bf16.msra.mxu0 %v947
      %1053 = vmatpush.bf16.msra.mxu0 %v946
      %1054 = vmatpush.bf16.msra.mxu0 %v945
      %1055 = vmatpush.bf16.msra.mxu0 %v944
      %1056 = vmatpush.bf16.msra.mxu0 %v943
      %1057 = vmatmul.bf16.gmra.mxu0 %v703
      %v1058 = vpop.f32.mrf.mxu0
      %v1059 = vadd.f32 %v1030, %v1058
      %v1060 = vpop.f32.mrf.mxu0
      %v1061 = vadd.f32 %v1032, %v1060
      %1062 = vmatmul.bf16.gmra.mxu0 %v704
      %v1063 = vpop.f32.mrf.mxu0
      %v1064 = vadd.f32 %v1035, %v1063
      %v1065 = vpop.f32.mrf.mxu0
      %v1066 = vadd.f32 %v1037, %v1065
      %1067 = vmatmul.bf16.gmra.mxu0 %v705
      %v1068 = vpop.f32.mrf.mxu0
      %v1069 = vadd.f32 %v1040, %v1068
      %v1070 = vpop.f32.mrf.mxu0
      %v1071 = vadd.f32 %v1042, %v1070
      %1072 = vmatmul.bf16.gmra.mxu0 %v706
      %v1073 = vpop.f32.mrf.mxu0
      %v1074 = vadd.f32 %v1045, %v1073
      %v1075 = vpop.f32.mrf.mxu0
      %v1076 = vadd.f32 %v1047, %v1075
      %1077 = vdwg.mxu0
      %1078 = vmatpush.bf16.msra.mxu0 %v958
      %1079 = vmatpush.bf16.msra.mxu0 %v957
      %1080 = vmatpush.bf16.msra.mxu0 %v956
      %1081 = vmatpush.bf16.msra.mxu0 %v955
      %1082 = vmatpush.bf16.msra.mxu0 %v954
      %1083 = vmatpush.bf16.msra.mxu0 %v953
      %1084 = vmatpush.bf16.msra.mxu0 %v952
      %1085 = vmatpush.bf16.msra.mxu0 %v951
      %1086 = vmatmul.bf16.gmra.mxu0 %v727
      %v1087 = vpop.f32.mrf.mxu0
      %v1088 = vadd.f32 %v1059, %v1087
      %v1089 = vpop.f32.mrf.mxu0
      %v1090 = vadd.f32 %v1061, %v1089
      %1091 = vmatmul.bf16.gmra.mxu0 %v728
      %v1092 = vpop.f32.mrf.mxu0
      %v1093 = vadd.f32 %v1064, %v1092
      %v1094 = vpop.f32.mrf.mxu0
      %v1095 = vadd.f32 %v1066, %v1094
      %1096 = vmatmul.bf16.gmra.mxu0 %v729
      %v1097 = vpop.f32.mrf.mxu0
      %v1098 = vadd.f32 %v1069, %v1097
      %v1099 = vpop.f32.mrf.mxu0
      %v1100 = vadd.f32 %v1071, %v1099
      %1101 = vmatmul.bf16.gmra.mxu0 %v730
      %v1102 = vpop.f32.mrf.mxu0
      %v1103 = vadd.f32 %v1074, %v1102
      %v1104 = vpop.f32.mrf.mxu0
      %v1105 = vadd.f32 %v1076, %v1104
      %1106 = vdwg.mxu0
      %v1107 = vpack.c.bf16 %v1088, %v1088
      %v1108 = vpack.c.bf16 %v1090, %v1090
      %v1109 = vpack.c.bf16 %v1093, %v1093
      %v1110 = vpack.c.bf16 %v1095, %v1095
      %v1111 = vpack.c.bf16 %v1098, %v1098
      %v1112 = vpack.c.bf16 %v1100, %v1100
      %v1113 = vpack.c.bf16 %v1103, %v1103
      %v1114 = vpack.c.bf16 %v1105, %v1105
      %1115 = vst [vmem:[%s204] sm:$0xf] %v1107
      %1116 = vst [vmem:[%s204 + $0x4] sm:$0xf] %v1108
      %1117 = vst [vmem:[%s204 + $0x8] sm:$0xf] %v1109
      %1118 = vst [vmem:[%s204 + $0xc] sm:$0xf] %v1110
      %1119 = vst [vmem:[%s204 + $0x10] sm:$0xf] %v1111
      %1120 = vst [vmem:[%s204 + $0x14] sm:$0xf] %v1112
      %1121 = vst [vmem:[%s204 + $0x18] sm:$0xf] %v1113
      %1122 = vst [vmem:[%s204 + $0x1c] sm:$0xf] %v1114
      %v1123 = vadd.f32 %v1088, %v1090
      %v1124 = vadd.f32 %v1123, %v1093
      %v1125 = vadd.f32 %v1124, %v1095
      %v1126 = vadd.f32 %v1125, %v1098
      %v1127 = vadd.f32 %v1126, %v1100
      %v1128 = vadd.f32 %v1127, %v1103
      %v1129 = vadd.f32 %v1128, %v1105
      %v1130 = vrot.slane %v1129, 4
      %v1131 = vadd.f32 %v1129, %v1130
      %v1132 = vrot.slane %v1131, 2
      %v1133 = vadd.f32 %v1131, %v1132
      %v1134 = vrot.slane %v1133, 1
      %v1135 = vadd.f32 %v1133, %v1134
      %v1136 = vadd.f32 %v1135, 0.0
      %v1137 = vmul.f32 %v1088, %v1088
      %v1138 = vmul.f32 %v1090, %v1090
      %v1139 = vmul.f32 %v1093, %v1093
      %v1140 = vmul.f32 %v1095, %v1095
      %v1141 = vmul.f32 %v1098, %v1098
      %v1142 = vmul.f32 %v1100, %v1100
      %v1143 = vmul.f32 %v1103, %v1103
      %v1144 = vmul.f32 %v1105, %v1105
      %v1145 = vadd.f32 %v1137, %v1138
      %v1146 = vadd.f32 %v1145, %v1139
      %v1147 = vadd.f32 %v1146, %v1140
      %v1148 = vadd.f32 %v1147, %v1141
      %v1149 = vadd.f32 %v1148, %v1142
      %v1150 = vadd.f32 %v1149, %v1143
      %v1151 = vadd.f32 %v1150, %v1144
      %v1152 = vrot.slane %v1151, 4
      %v1153 = vadd.f32 %v1151, %v1152
      %v1154 = vrot.slane %v1153, 2
      %v1155 = vadd.f32 %v1153, %v1154
      %v1156 = vrot.slane %v1155, 1
      %v1157 = vadd.f32 %v1155, %v1156
      %v1158 = vadd.f32 %v1157, 0.0
      %v1159 = vld [vmem:[#allocation2 + $0x1] sm:$0xff]
      %v1160 = vld [vmem:[#allocation2 + $0x11] sm:$0xff]
      %v1161 = vld [vmem:[#allocation2 + $0x21] sm:$0xff]
      %v1162 = vld [vmem:[#allocation2 + $0x31] sm:$0xff]
      %v1163 = vld [vmem:[#allocation2 + $0x41] sm:$0xff]
      %v1164 = vld [vmem:[#allocation2 + $0x51] sm:$0xff]
      %v1165 = vld [vmem:[#allocation2 + $0x61] sm:$0xff]
      %v1166 = vld [vmem:[#allocation2 + $0x71] sm:$0xff]
      %v1167 = vpack.c.bf16 %v1159, %v1159
      %v1168 = vpack.c.bf16 %v1160, %v1160
      %v1169 = vpack.c.bf16 %v1161, %v1161
      %v1170 = vpack.c.bf16 %v1162, %v1162
      %v1171 = vpack.c.bf16 %v1163, %v1163
      %v1172 = vpack.c.bf16 %v1164, %v1164
      %v1173 = vpack.c.bf16 %v1165, %v1165
      %v1174 = vpack.c.bf16 %v1166, %v1166
      %v1175 = vld [vmem:[#allocation2 + $0x2] sm:$0xff]
      %v1176 = vld [vmem:[#allocation2 + $0x12] sm:$0xff]
      %v1177 = vld [vmem:[#allocation2 + $0x22] sm:$0xff]
      %v1178 = vld [vmem:[#allocation2 + $0x32] sm:$0xff]
      %v1179 = vld [vmem:[#allocation2 + $0x42] sm:$0xff]
      %v1180 = vld [vmem:[#allocation2 + $0x52] sm:$0xff]
      %v1181 = vld [vmem:[#allocation2 + $0x62] sm:$0xff]
      %v1182 = vld [vmem:[#allocation2 + $0x72] sm:$0xff]
      %v1183 = vpack.c.bf16 %v1175, %v1175
      %v1184 = vpack.c.bf16 %v1176, %v1176
      %v1185 = vpack.c.bf16 %v1177, %v1177
      %v1186 = vpack.c.bf16 %v1178, %v1178
      %v1187 = vpack.c.bf16 %v1179, %v1179
      %v1188 = vpack.c.bf16 %v1180, %v1180
      %v1189 = vpack.c.bf16 %v1181, %v1181
      %v1190 = vpack.c.bf16 %v1182, %v1182
      %v1191 = vld [vmem:[%s566 + $0x1] sm:$0xff]
      %v1192 = vld [vmem:[%s566 + $0x11] sm:$0xff]
      %v1193 = vld [vmem:[%s566 + $0x21] sm:$0xff]
      %v1194 = vld [vmem:[%s566 + $0x31] sm:$0xff]
      %v1195 = vld [vmem:[%s566 + $0x41] sm:$0xff]
      %v1196 = vld [vmem:[%s566 + $0x51] sm:$0xff]
      %v1197 = vld [vmem:[%s566 + $0x61] sm:$0xff]
      %v1198 = vld [vmem:[%s566 + $0x71] sm:$0xff]
      %v1199 = vpack.c.bf16 %v1191, %v1191
      %v1200 = vpack.c.bf16 %v1192, %v1192
      %v1201 = vpack.c.bf16 %v1193, %v1193
      %v1202 = vpack.c.bf16 %v1194, %v1194
      %v1203 = vpack.c.bf16 %v1195, %v1195
      %v1204 = vpack.c.bf16 %v1196, %v1196
      %v1205 = vpack.c.bf16 %v1197, %v1197
      %v1206 = vpack.c.bf16 %v1198, %v1198
      %v1207 = vld [vmem:[%s566 + $0x2] sm:$0xff]
      %v1208 = vld [vmem:[%s566 + $0x12] sm:$0xff]
      %v1209 = vld [vmem:[%s566 + $0x22] sm:$0xff]
      %v1210 = vld [vmem:[%s566 + $0x32] sm:$0xff]
      %v1211 = vld [vmem:[%s566 + $0x42] sm:$0xff]
      %v1212 = vld [vmem:[%s566 + $0x52] sm:$0xff]
      %v1213 = vld [vmem:[%s566 + $0x62] sm:$0xff]
      %v1214 = vld [vmem:[%s566 + $0x72] sm:$0xff]
      %v1215 = vpack.c.bf16 %v1207, %v1207
      %v1216 = vpack.c.bf16 %v1208, %v1208
      %v1217 = vpack.c.bf16 %v1209, %v1209
      %v1218 = vpack.c.bf16 %v1210, %v1210
      %v1219 = vpack.c.bf16 %v1211, %v1211
      %v1220 = vpack.c.bf16 %v1212, %v1212
      %v1221 = vpack.c.bf16 %v1213, %v1213
      %v1222 = vpack.c.bf16 %v1214, %v1214
      %v1231 = vunpack.c.l.b16 %v1167
      %v1232 = vunpack.c.l.b16 %v1168
      %v1233 = vunpack.c.l.b16 %v1169
      %v1234 = vunpack.c.l.b16 %v1170
      %v1235 = vunpack.c.l.b16 %v1171
      %v1236 = vunpack.c.l.b16 %v1172
      %v1237 = vunpack.c.l.b16 %v1173
      %v1238 = vunpack.c.l.b16 %v1174
      %v1239 = vpack.c.b16 %v1232, %v1231
      %v1240 = vpack.c.b16 %v1234, %v1233
      %v1241 = vpack.c.b16 %v1236, %v1235
      %v1242 = vpack.c.b16 %v1238, %v1237
      %v1255 = vunpack.c.l.b16 %v1183
      %v1256 = vunpack.c.l.b16 %v1184
      %v1257 = vunpack.c.l.b16 %v1185
      %v1258 = vunpack.c.l.b16 %v1186
      %v1259 = vunpack.c.l.b16 %v1187
      %v1260 = vunpack.c.l.b16 %v1188
      %v1261 = vunpack.c.l.b16 %v1189
      %v1262 = vunpack.c.l.b16 %v1190
      %v1263 = vpack.c.b16 %v1256, %v1255
      %v1264 = vpack.c.b16 %v1258, %v1257
      %v1265 = vpack.c.b16 %v1260, %v1259
      %v1266 = vpack.c.b16 %v1262, %v1261
      %v1279 = vunpack.c.l.b16 %v1199
      %v1280 = vunpack.c.l.b16 %v1200
      %v1281 = vunpack.c.l.b16 %v1201
      %v1282 = vunpack.c.l.b16 %v1202
      %v1283 = vunpack.c.l.b16 %v1203
      %v1284 = vunpack.c.l.b16 %v1204
      %v1285 = vunpack.c.l.b16 %v1205
      %v1286 = vunpack.c.l.b16 %v1206
      %v1287 = vpack.c.b16 %v1280, %v1279
      %v1288 = vpack.c.b16 %v1282, %v1281
      %v1289 = vpack.c.b16 %v1284, %v1283
      %v1290 = vpack.c.b16 %v1286, %v1285
      %v1303 = vunpack.c.l.b16 %v1215
      %v1304 = vunpack.c.l.b16 %v1216
      %v1305 = vunpack.c.l.b16 %v1217
      %v1306 = vunpack.c.l.b16 %v1218
      %v1307 = vunpack.c.l.b16 %v1219
      %v1308 = vunpack.c.l.b16 %v1220
      %v1309 = vunpack.c.l.b16 %v1221
      %v1310 = vunpack.c.l.b16 %v1222
      %v1311 = vpack.c.b16 %v1304, %v1303
      %v1312 = vpack.c.b16 %v1306, %v1305
      %v1313 = vpack.c.b16 %v1308, %v1307
      %v1314 = vpack.c.b16 %v1310, %v1309
      %s1319 = scalar_lea.vmem %s2, 256
      %v1320 = vld [vmem:[%s1319] sm:$0xf]
      %v1321 = vld [vmem:[%s1319 + $0x4] sm:$0xf]
      %v1322 = vld [vmem:[%s1319 + $0x8] sm:$0xf]
      %v1323 = vld [vmem:[%s1319 + $0xc] sm:$0xf]
      %v1324 = vld [vmem:[%s1319 + $0x10] sm:$0xf]
      %v1325 = vld [vmem:[%s1319 + $0x14] sm:$0xf]
      %v1326 = vld [vmem:[%s1319 + $0x18] sm:$0xf]
      %v1327 = vld [vmem:[%s1319 + $0x1c] sm:$0xf]
      %v1328 = vld [vmem:[%s1319 + $0x20] sm:$0xf]
      %v1329 = vld [vmem:[%s1319 + $0x24] sm:$0xf]
      %v1330 = vld [vmem:[%s1319 + $0x28] sm:$0xf]
      %v1331 = vld [vmem:[%s1319 + $0x2c] sm:$0xf]
      %v1332 = vld [vmem:[%s1319 + $0x30] sm:$0xf]
      %v1333 = vld [vmem:[%s1319 + $0x34] sm:$0xf]
      %v1334 = vld [vmem:[%s1319 + $0x38] sm:$0xf]
      %v1335 = vld [vmem:[%s1319 + $0x3c] sm:$0xf]
      %v1336 = vld [vmem:[%s1319 + $0x40] sm:$0xf]
      %v1337 = vld [vmem:[%s1319 + $0x44] sm:$0xf]
      %v1338 = vld [vmem:[%s1319 + $0x48] sm:$0xf]
      %v1339 = vld [vmem:[%s1319 + $0x4c] sm:$0xf]
      %v1340 = vld [vmem:[%s1319 + $0x50] sm:$0xf]
      %v1341 = vld [vmem:[%s1319 + $0x54] sm:$0xf]
      %v1342 = vld [vmem:[%s1319 + $0x58] sm:$0xf]
      %v1343 = vld [vmem:[%s1319 + $0x5c] sm:$0xf]
      %v1344 = vld [vmem:[%s1319 + $0x60] sm:$0xf]
      %v1345 = vld [vmem:[%s1319 + $0x64] sm:$0xf]
      %v1346 = vld [vmem:[%s1319 + $0x68] sm:$0xf]
      %v1347 = vld [vmem:[%s1319 + $0x6c] sm:$0xf]
      %v1348 = vld [vmem:[%s1319 + $0x70] sm:$0xf]
      %v1349 = vld [vmem:[%s1319 + $0x74] sm:$0xf]
      %v1350 = vld [vmem:[%s1319 + $0x78] sm:$0xf]
      %v1351 = vld [vmem:[%s1319 + $0x7c] sm:$0xf]
      %v1352 = vld [vmem:[%s1319 + $0x80] sm:$0xf]
      %v1353 = vld [vmem:[%s1319 + $0x84] sm:$0xf]
      %v1354 = vld [vmem:[%s1319 + $0x88] sm:$0xf]
      %v1355 = vld [vmem:[%s1319 + $0x8c] sm:$0xf]
      %v1356 = vld [vmem:[%s1319 + $0x90] sm:$0xf]
      %v1357 = vld [vmem:[%s1319 + $0x94] sm:$0xf]
      %v1358 = vld [vmem:[%s1319 + $0x98] sm:$0xf]
      %v1359 = vld [vmem:[%s1319 + $0x9c] sm:$0xf]
      %v1360 = vld [vmem:[%s1319 + $0xa0] sm:$0xf]
      %v1361 = vld [vmem:[%s1319 + $0xa4] sm:$0xf]
      %v1362 = vld [vmem:[%s1319 + $0xa8] sm:$0xf]
      %v1363 = vld [vmem:[%s1319 + $0xac] sm:$0xf]
      %v1364 = vld [vmem:[%s1319 + $0xb0] sm:$0xf]
      %v1365 = vld [vmem:[%s1319 + $0xb4] sm:$0xf]
      %v1366 = vld [vmem:[%s1319 + $0xb8] sm:$0xf]
      %v1367 = vld [vmem:[%s1319 + $0xbc] sm:$0xf]
      %v1368 = vld [vmem:[%s1319 + $0xc0] sm:$0xf]
      %v1369 = vld [vmem:[%s1319 + $0xc4] sm:$0xf]
      %v1370 = vld [vmem:[%s1319 + $0xc8] sm:$0xf]
      %v1371 = vld [vmem:[%s1319 + $0xcc] sm:$0xf]
      %v1372 = vld [vmem:[%s1319 + $0xd0] sm:$0xf]
      %v1373 = vld [vmem:[%s1319 + $0xd4] sm:$0xf]
      %v1374 = vld [vmem:[%s1319 + $0xd8] sm:$0xf]
      %v1375 = vld [vmem:[%s1319 + $0xdc] sm:$0xf]
      %v1376 = vld [vmem:[%s1319 + $0xe0] sm:$0xf]
      %v1377 = vld [vmem:[%s1319 + $0xe4] sm:$0xf]
      %v1378 = vld [vmem:[%s1319 + $0xe8] sm:$0xf]
      %v1379 = vld [vmem:[%s1319 + $0xec] sm:$0xf]
      %v1380 = vld [vmem:[%s1319 + $0xf0] sm:$0xf]
      %v1381 = vld [vmem:[%s1319 + $0xf4] sm:$0xf]
      %v1382 = vld [vmem:[%s1319 + $0xf8] sm:$0xf]
      %v1383 = vld [vmem:[%s1319 + $0xfc] sm:$0xf]
      %v1448 = vunpack.c.l.b16 %v1320
      %v1449 = vunpack.c.l.b16 %v1321
      %v1450 = vunpack.c.l.b16 %v1322
      %v1451 = vunpack.c.l.b16 %v1323
      %v1452 = vunpack.c.l.b16 %v1324
      %v1453 = vunpack.c.l.b16 %v1325
      %v1454 = vunpack.c.l.b16 %v1326
      %v1455 = vunpack.c.l.b16 %v1327
      %v1456 = vunpack.c.l.b16 %v1328
      %v1457 = vunpack.c.l.b16 %v1329
      %v1458 = vunpack.c.l.b16 %v1330
      %v1459 = vunpack.c.l.b16 %v1331
      %v1460 = vunpack.c.l.b16 %v1332
      %v1461 = vunpack.c.l.b16 %v1333
      %v1462 = vunpack.c.l.b16 %v1334
      %v1463 = vunpack.c.l.b16 %v1335
      %v1464 = vunpack.c.l.b16 %v1336
      %v1465 = vunpack.c.l.b16 %v1337
      %v1466 = vunpack.c.l.b16 %v1338
      %v1467 = vunpack.c.l.b16 %v1339
      %v1468 = vunpack.c.l.b16 %v1340
      %v1469 = vunpack.c.l.b16 %v1341
      %v1470 = vunpack.c.l.b16 %v1342
      %v1471 = vunpack.c.l.b16 %v1343
      %v1472 = vunpack.c.l.b16 %v1344
      %v1473 = vunpack.c.l.b16 %v1345
      %v1474 = vunpack.c.l.b16 %v1346
      %v1475 = vunpack.c.l.b16 %v1347
      %v1476 = vunpack.c.l.b16 %v1348
      %v1477 = vunpack.c.l.b16 %v1349
      %v1478 = vunpack.c.l.b16 %v1350
      %v1479 = vunpack.c.l.b16 %v1351
      %v1480 = vunpack.c.l.b16 %v1352
      %v1481 = vunpack.c.l.b16 %v1353
      %v1482 = vunpack.c.l.b16 %v1354
      %v1483 = vunpack.c.l.b16 %v1355
      %v1484 = vunpack.c.l.b16 %v1356
      %v1485 = vunpack.c.l.b16 %v1357
      %v1486 = vunpack.c.l.b16 %v1358
      %v1487 = vunpack.c.l.b16 %v1359
      %v1488 = vunpack.c.l.b16 %v1360
      %v1489 = vunpack.c.l.b16 %v1361
      %v1490 = vunpack.c.l.b16 %v1362
      %v1491 = vunpack.c.l.b16 %v1363
      %v1492 = vunpack.c.l.b16 %v1364
      %v1493 = vunpack.c.l.b16 %v1365
      %v1494 = vunpack.c.l.b16 %v1366
      %v1495 = vunpack.c.l.b16 %v1367
      %v1496 = vunpack.c.l.b16 %v1368
      %v1497 = vunpack.c.l.b16 %v1369
      %v1498 = vunpack.c.l.b16 %v1370
      %v1499 = vunpack.c.l.b16 %v1371
      %v1500 = vunpack.c.l.b16 %v1372
      %v1501 = vunpack.c.l.b16 %v1373
      %v1502 = vunpack.c.l.b16 %v1374
      %v1503 = vunpack.c.l.b16 %v1375
      %v1504 = vunpack.c.l.b16 %v1376
      %v1505 = vunpack.c.l.b16 %v1377
      %v1506 = vunpack.c.l.b16 %v1378
      %v1507 = vunpack.c.l.b16 %v1379
      %v1508 = vunpack.c.l.b16 %v1380
      %v1509 = vunpack.c.l.b16 %v1381
      %v1510 = vunpack.c.l.b16 %v1382
      %v1511 = vunpack.c.l.b16 %v1383
      %v1512 = vpack.c.b16 %v1449, %v1448
      %v1513 = vpack.c.b16 %v1451, %v1450
      %v1514 = vpack.c.b16 %v1453, %v1452
      %v1515 = vpack.c.b16 %v1455, %v1454
      %v1516 = vpack.c.b16 %v1457, %v1456
      %v1517 = vpack.c.b16 %v1459, %v1458
      %v1518 = vpack.c.b16 %v1461, %v1460
      %v1519 = vpack.c.b16 %v1463, %v1462
      %v1520 = vpack.c.b16 %v1465, %v1464
      %v1521 = vpack.c.b16 %v1467, %v1466
      %v1522 = vpack.c.b16 %v1469, %v1468
      %v1523 = vpack.c.b16 %v1471, %v1470
      %v1524 = vpack.c.b16 %v1473, %v1472
      %v1525 = vpack.c.b16 %v1475, %v1474
      %v1526 = vpack.c.b16 %v1477, %v1476
      %v1527 = vpack.c.b16 %v1479, %v1478
      %v1528 = vpack.c.b16 %v1481, %v1480
      %v1529 = vpack.c.b16 %v1483, %v1482
      %v1530 = vpack.c.b16 %v1485, %v1484
      %v1531 = vpack.c.b16 %v1487, %v1486
      %v1532 = vpack.c.b16 %v1489, %v1488
      %v1533 = vpack.c.b16 %v1491, %v1490
      %v1534 = vpack.c.b16 %v1493, %v1492
      %v1535 = vpack.c.b16 %v1495, %v1494
      %v1536 = vpack.c.b16 %v1497, %v1496
      %v1537 = vpack.c.b16 %v1499, %v1498
      %v1538 = vpack.c.b16 %v1501, %v1500
      %v1539 = vpack.c.b16 %v1503, %v1502
      %v1540 = vpack.c.b16 %v1505, %v1504
      %v1541 = vpack.c.b16 %v1507, %v1506
      %v1542 = vpack.c.b16 %v1509, %v1508
      %v1543 = vpack.c.b16 %v1511, %v1510
      %1576 = vmatpush.bf16.msra.mxu0 %v1519
      %1577 = vmatpush.bf16.msra.mxu0 %v1518
      %1578 = vmatpush.bf16.msra.mxu0 %v1517
      %1579 = vmatpush.bf16.msra.mxu0 %v1516
      %1580 = vmatpush.bf16.msra.mxu0 %v1515
      %1581 = vmatpush.bf16.msra.mxu0 %v1514
      %1582 = vmatpush.bf16.msra.mxu0 %v1513
      %1583 = vmatpush.bf16.msra.mxu0 %v1512
      %1584 = vmatmul.bf16.gmra.mxu0 %v1239
      %v1585 = vpop.f32.mrf.mxu0
      %v1586 = vadd.f32 0.0, %v1585
      %v1587 = vpop.f32.mrf.mxu0
      %v1588 = vadd.f32 0.0, %v1587
      %1589 = vmatmul.bf16.gmra.mxu0 %v1240
      %v1590 = vpop.f32.mrf.mxu0
      %v1591 = vadd.f32 0.0, %v1590
      %v1592 = vpop.f32.mrf.mxu0
      %v1593 = vadd.f32 0.0, %v1592
      %1594 = vmatmul.bf16.gmra.mxu0 %v1241
      %v1595 = vpop.f32.mrf.mxu0
      %v1596 = vadd.f32 0.0, %v1595
      %v1597 = vpop.f32.mrf.mxu0
      %v1598 = vadd.f32 0.0, %v1597
      %1599 = vmatmul.bf16.gmra.mxu0 %v1242
      %v1600 = vpop.f32.mrf.mxu0
      %v1601 = vadd.f32 0.0, %v1600
      %v1602 = vpop.f32.mrf.mxu0
      %v1603 = vadd.f32 0.0, %v1602
      %1604 = vdwg.mxu0
      %1605 = vmatpush.bf16.msra.mxu0 %v1527
      %1606 = vmatpush.bf16.msra.mxu0 %v1526
      %1607 = vmatpush.bf16.msra.mxu0 %v1525
      %1608 = vmatpush.bf16.msra.mxu0 %v1524
      %1609 = vmatpush.bf16.msra.mxu0 %v1523
      %1610 = vmatpush.bf16.msra.mxu0 %v1522
      %1611 = vmatpush.bf16.msra.mxu0 %v1521
      %1612 = vmatpush.bf16.msra.mxu0 %v1520
      %1613 = vmatmul.bf16.gmra.mxu0 %v1263
      %v1614 = vpop.f32.mrf.mxu0
      %v1615 = vadd.f32 %v1586, %v1614
      %v1616 = vpop.f32.mrf.mxu0
      %v1617 = vadd.f32 %v1588, %v1616
      %1618 = vmatmul.bf16.gmra.mxu0 %v1264
      %v1619 = vpop.f32.mrf.mxu0
      %v1620 = vadd.f32 %v1591, %v1619
      %v1621 = vpop.f32.mrf.mxu0
      %v1622 = vadd.f32 %v1593, %v1621
      %1623 = vmatmul.bf16.gmra.mxu0 %v1265
      %v1624 = vpop.f32.mrf.mxu0
      %v1625 = vadd.f32 %v1596, %v1624
      %v1626 = vpop.f32.mrf.mxu0
      %v1627 = vadd.f32 %v1598, %v1626
      %1628 = vmatmul.bf16.gmra.mxu0 %v1266
      %v1629 = vpop.f32.mrf.mxu0
      %v1630 = vadd.f32 %v1601, %v1629
      %v1631 = vpop.f32.mrf.mxu0
      %v1632 = vadd.f32 %v1603, %v1631
      %1633 = vdwg.mxu0
      %1634 = vmatpush.bf16.msra.mxu0 %v1535
      %1635 = vmatpush.bf16.msra.mxu0 %v1534
      %1636 = vmatpush.bf16.msra.mxu0 %v1533
      %1637 = vmatpush.bf16.msra.mxu0 %v1532
      %1638 = vmatpush.bf16.msra.mxu0 %v1531
      %1639 = vmatpush.bf16.msra.mxu0 %v1530
      %1640 = vmatpush.bf16.msra.mxu0 %v1529
      %1641 = vmatpush.bf16.msra.mxu0 %v1528
      %1642 = vmatmul.bf16.gmra.mxu0 %v1287
      %v1643 = vpop.f32.mrf.mxu0
      %v1644 = vadd.f32 %v1615, %v1643
      %v1645 = vpop.f32.mrf.mxu0
      %v1646 = vadd.f32 %v1617, %v1645
      %1647 = vmatmul.bf16.gmra.mxu0 %v1288
      %v1648 = vpop.f32.mrf.mxu0
      %v1649 = vadd.f32 %v1620, %v1648
      %v1650 = vpop.f32.mrf.mxu0
      %v1651 = vadd.f32 %v1622, %v1650
      %1652 = vmatmul.bf16.gmra.mxu0 %v1289
      %v1653 = vpop.f32.mrf.mxu0
      %v1654 = vadd.f32 %v1625, %v1653
      %v1655 = vpop.f32.mrf.mxu0
      %v1656 = vadd.f32 %v1627, %v1655
      %1657 = vmatmul.bf16.gmra.mxu0 %v1290
      %v1658 = vpop.f32.mrf.mxu0
      %v1659 = vadd.f32 %v1630, %v1658
      %v1660 = vpop.f32.mrf.mxu0
      %v1661 = vadd.f32 %v1632, %v1660
      %1662 = vdwg.mxu0
      %1663 = vmatpush.bf16.msra.mxu0 %v1543
      %1664 = vmatpush.bf16.msra.mxu0 %v1542
      %1665 = vmatpush.bf16.msra.mxu0 %v1541
      %1666 = vmatpush.bf16.msra.mxu0 %v1540
      %1667 = vmatpush.bf16.msra.mxu0 %v1539
      %1668 = vmatpush.bf16.msra.mxu0 %v1538
      %1669 = vmatpush.bf16.msra.mxu0 %v1537
      %1670 = vmatpush.bf16.msra.mxu0 %v1536
      %1671 = vmatmul.bf16.gmra.mxu0 %v1311
      %v1672 = vpop.f32.mrf.mxu0
      %v1673 = vadd.f32 %v1644, %v1672
      %v1674 = vpop.f32.mrf.mxu0
      %v1675 = vadd.f32 %v1646, %v1674
      %1676 = vmatmul.bf16.gmra.mxu0 %v1312
      %v1677 = vpop.f32.mrf.mxu0
      %v1678 = vadd.f32 %v1649, %v1677
      %v1679 = vpop.f32.mrf.mxu0
      %v1680 = vadd.f32 %v1651, %v1679
      %1681 = vmatmul.bf16.gmra.mxu0 %v1313
      %v1682 = vpop.f32.mrf.mxu0
      %v1683 = vadd.f32 %v1654, %v1682
      %v1684 = vpop.f32.mrf.mxu0
      %v1685 = vadd.f32 %v1656, %v1684
      %1686 = vmatmul.bf16.gmra.mxu0 %v1314
      %v1687 = vpop.f32.mrf.mxu0
      %v1688 = vadd.f32 %v1659, %v1687
      %v1689 = vpop.f32.mrf.mxu0
      %v1690 = vadd.f32 %v1661, %v1689
      %1691 = vdwg.mxu0
      %v1692 = vpack.c.bf16 %v1673, %v1673
      %v1693 = vpack.c.bf16 %v1675, %v1675
      %v1694 = vpack.c.bf16 %v1678, %v1678
      %v1695 = vpack.c.bf16 %v1680, %v1680
      %v1696 = vpack.c.bf16 %v1683, %v1683
      %v1697 = vpack.c.bf16 %v1685, %v1685
      %v1698 = vpack.c.bf16 %v1688, %v1688
      %v1699 = vpack.c.bf16 %v1690, %v1690
      %s1700 = scalar_lea.vmem %s204, 32
      %1701 = vst [vmem:[%s1700] sm:$0xf] %v1692
      %1702 = vst [vmem:[%s1700 + $0x4] sm:$0xf] %v1693
      %1703 = vst [vmem:[%s1700 + $0x8] sm:$0xf] %v1694
      %1704 = vst [vmem:[%s1700 + $0xc] sm:$0xf] %v1695
      %1705 = vst [vmem:[%s1700 + $0x10] sm:$0xf] %v1696
      %1706 = vst [vmem:[%s1700 + $0x14] sm:$0xf] %v1697
      %1707 = vst [vmem:[%s1700 + $0x18] sm:$0xf] %v1698
      %1708 = vst [vmem:[%s1700 + $0x1c] sm:$0xf] %v1699
      %v1709 = vadd.f32 %v1673, %v1675
      %v1710 = vadd.f32 %v1709, %v1678
      %v1711 = vadd.f32 %v1710, %v1680
      %v1712 = vadd.f32 %v1711, %v1683
      %v1713 = vadd.f32 %v1712, %v1685
      %v1714 = vadd.f32 %v1713, %v1688
      %v1715 = vadd.f32 %v1714, %v1690
      %v1716 = vrot.slane %v1715, 4
      %v1717 = vadd.f32 %v1715, %v1716
      %v1718 = vrot.slane %v1717, 2
      %v1719 = vadd.f32 %v1717, %v1718
      %v1720 = vrot.slane %v1719, 1
      %v1721 = vadd.f32 %v1719, %v1720
      %v1722 = vadd.f32 %v1136, %v1721
      %v1723 = vmul.f32 %v1673, %v1673
      %v1724 = vmul.f32 %v1675, %v1675
      %v1725 = vmul.f32 %v1678, %v1678
      %v1726 = vmul.f32 %v1680, %v1680
      %v1727 = vmul.f32 %v1683, %v1683
      %v1728 = vmul.f32 %v1685, %v1685
      %v1729 = vmul.f32 %v1688, %v1688
      %v1730 = vmul.f32 %v1690, %v1690
      %v1731 = vadd.f32 %v1723, %v1724
      %v1732 = vadd.f32 %v1731, %v1725
      %v1733 = vadd.f32 %v1732, %v1726
      %v1734 = vadd.f32 %v1733, %v1727
      %v1735 = vadd.f32 %v1734, %v1728
      %v1736 = vadd.f32 %v1735, %v1729
      %v1737 = vadd.f32 %v1736, %v1730
      %v1738 = vrot.slane %v1737, 4
      %v1739 = vadd.f32 %v1737, %v1738
      %v1740 = vrot.slane %v1739, 2
      %v1741 = vadd.f32 %v1739, %v1740
      %v1742 = vrot.slane %v1741, 1
      %v1743 = vadd.f32 %v1741, %v1742
      %v1744 = vadd.f32 %v1158, %v1743
      %v1745 = vld [vmem:[%s566] sm:$0xff]
      %v1746 = vld [vmem:[%s566 + $0x10] sm:$0xff]
      %v1747 = vld [vmem:[%s566 + $0x20] sm:$0xff]
      %v1748 = vld [vmem:[%s566 + $0x30] sm:$0xff]
      %v1749 = vld [vmem:[%s566 + $0x40] sm:$0xff]
      %v1750 = vld [vmem:[%s566 + $0x50] sm:$0xff]
      %v1751 = vld [vmem:[%s566 + $0x60] sm:$0xff]
      %v1752 = vld [vmem:[%s566 + $0x70] sm:$0xff]
      %v1753 = vpack.c.bf16 %v1745, %v1745
      %v1754 = vpack.c.bf16 %v1746, %v1746
      %v1755 = vpack.c.bf16 %v1747, %v1747
      %v1756 = vpack.c.bf16 %v1748, %v1748
      %v1757 = vpack.c.bf16 %v1749, %v1749
      %v1758 = vpack.c.bf16 %v1750, %v1750
      %v1759 = vpack.c.bf16 %v1751, %v1751
      %v1760 = vpack.c.bf16 %v1752, %v1752
      %v1761 = vld [vmem:[%s566 + $0x1] sm:$0xff]
      %v1762 = vld [vmem:[%s566 + $0x11] sm:$0xff]
      %v1763 = vld [vmem:[%s566 + $0x21] sm:$0xff]
      %v1764 = vld [vmem:[%s566 + $0x31] sm:$0xff]
      %v1765 = vld [vmem:[%s566 + $0x41] sm:$0xff]
      %v1766 = vld [vmem:[%s566 + $0x51] sm:$0xff]
      %v1767 = vld [vmem:[%s566 + $0x61] sm:$0xff]
      %v1768 = vld [vmem:[%s566 + $0x71] sm:$0xff]
      %v1769 = vpack.c.bf16 %v1761, %v1761
      %v1770 = vpack.c.bf16 %v1762, %v1762
      %v1771 = vpack.c.bf16 %v1763, %v1763
      %v1772 = vpack.c.bf16 %v1764, %v1764
      %v1773 = vpack.c.bf16 %v1765, %v1765
      %v1774 = vpack.c.bf16 %v1766, %v1766
      %v1775 = vpack.c.bf16 %v1767, %v1767
      %v1776 = vpack.c.bf16 %v1768, %v1768
      %s1777 = scalar_lea.vmem [#allocation2], 32
      %v1778 = vld [vmem:[%s1777] sm:$0xff]
      %v1779 = vld [vmem:[%s1777 + $0x10] sm:$0xff]
      %v1780 = vld [vmem:[%s1777 + $0x20] sm:$0xff]
      %v1781 = vld [vmem:[%s1777 + $0x30] sm:$0xff]
      %v1782 = vld [vmem:[%s1777 + $0x40] sm:$0xff]
      %v1783 = vld [vmem:[%s1777 + $0x50] sm:$0xff]
      %v1784 = vld [vmem:[%s1777 + $0x60] sm:$0xff]
      %v1785 = vld [vmem:[%s1777 + $0x70] sm:$0xff]
      %v1786 = vpack.c.bf16 %v1778, %v1778
      %v1787 = vpack.c.bf16 %v1779, %v1779
      %v1788 = vpack.c.bf16 %v1780, %v1780
      %v1789 = vpack.c.bf16 %v1781, %v1781
      %v1790 = vpack.c.bf16 %v1782, %v1782
      %v1791 = vpack.c.bf16 %v1783, %v1783
      %v1792 = vpack.c.bf16 %v1784, %v1784
      %v1793 = vpack.c.bf16 %v1785, %v1785
      %v1794 = vld [vmem:[%s1777 + $0x1] sm:$0xff]
      %v1795 = vld [vmem:[%s1777 + $0x11] sm:$0xff]
      %v1796 = vld [vmem:[%s1777 + $0x21] sm:$0xff]
      %v1797 = vld [vmem:[%s1777 + $0x31] sm:$0xff]
      %v1798 = vld [vmem:[%s1777 + $0x41] sm:$0xff]
      %v1799 = vld [vmem:[%s1777 + $0x51] sm:$0xff]
      %v1800 = vld [vmem:[%s1777 + $0x61] sm:$0xff]
      %v1801 = vld [vmem:[%s1777 + $0x71] sm:$0xff]
      %v1802 = vpack.c.bf16 %v1794, %v1794
      %v1803 = vpack.c.bf16 %v1795, %v1795
      %v1804 = vpack.c.bf16 %v1796, %v1796
      %v1805 = vpack.c.bf16 %v1797, %v1797
      %v1806 = vpack.c.bf16 %v1798, %v1798
      %v1807 = vpack.c.bf16 %v1799, %v1799
      %v1808 = vpack.c.bf16 %v1800, %v1800
      %v1809 = vpack.c.bf16 %v1801, %v1801
      %v1818 = vunpack.c.l.b16 %v1753
      %v1819 = vunpack.c.l.b16 %v1754
      %v1820 = vunpack.c.l.b16 %v1755
      %v1821 = vunpack.c.l.b16 %v1756
      %v1822 = vunpack.c.l.b16 %v1757
      %v1823 = vunpack.c.l.b16 %v1758
      %v1824 = vunpack.c.l.b16 %v1759
      %v1825 = vunpack.c.l.b16 %v1760
      %v1826 = vpack.c.b16 %v1819, %v1818
      %v1827 = vpack.c.b16 %v1821, %v1820
      %v1828 = vpack.c.b16 %v1823, %v1822
      %v1829 = vpack.c.b16 %v1825, %v1824
      %v1842 = vunpack.c.l.b16 %v1769
      %v1843 = vunpack.c.l.b16 %v1770
      %v1844 = vunpack.c.l.b16 %v1771
      %v1845 = vunpack.c.l.b16 %v1772
      %v1846 = vunpack.c.l.b16 %v1773
      %v1847 = vunpack.c.l.b16 %v1774
      %v1848 = vunpack.c.l.b16 %v1775
      %v1849 = vunpack.c.l.b16 %v1776
      %v1850 = vpack.c.b16 %v1843, %v1842
      %v1851 = vpack.c.b16 %v1845, %v1844
      %v1852 = vpack.c.b16 %v1847, %v1846
      %v1853 = vpack.c.b16 %v1849, %v1848
      %v1866 = vunpack.c.l.b16 %v1786
      %v1867 = vunpack.c.l.b16 %v1787
      %v1868 = vunpack.c.l.b16 %v1788
      %v1869 = vunpack.c.l.b16 %v1789
      %v1870 = vunpack.c.l.b16 %v1790
      %v1871 = vunpack.c.l.b16 %v1791
      %v1872 = vunpack.c.l.b16 %v1792
      %v1873 = vunpack.c.l.b16 %v1793
      %v1874 = vpack.c.b16 %v1867, %v1866
      %v1875 = vpack.c.b16 %v1869, %v1868
      %v1876 = vpack.c.b16 %v1871, %v1870
      %v1877 = vpack.c.b16 %v1873, %v1872
      %v1890 = vunpack.c.l.b16 %v1802
      %v1891 = vunpack.c.l.b16 %v1803
      %v1892 = vunpack.c.l.b16 %v1804
      %v1893 = vunpack.c.l.b16 %v1805
      %v1894 = vunpack.c.l.b16 %v1806
      %v1895 = vunpack.c.l.b16 %v1807
      %v1896 = vunpack.c.l.b16 %v1808
      %v1897 = vunpack.c.l.b16 %v1809
      %v1898 = vpack.c.b16 %v1891, %v1890
      %v1899 = vpack.c.b16 %v1893, %v1892
      %v1900 = vpack.c.b16 %v1895, %v1894
      %v1901 = vpack.c.b16 %v1897, %v1896
      %s1906 = scalar_lea.vmem %s2, 512
      %v1907 = vld [vmem:[%s1906] sm:$0xf]
      %v1908 = vld [vmem:[%s1906 + $0x4] sm:$0xf]
      %v1909 = vld [vmem:[%s1906 + $0x8] sm:$0xf]
      %v1910 = vld [vmem:[%s1906 + $0xc] sm:$0xf]
      %v1911 = vld [vmem:[%s1906 + $0x10] sm:$0xf]
      %v1912 = vld [vmem:[%s1906 + $0x14] sm:$0xf]
      %v1913 = vld [vmem:[%s1906 + $0x18] sm:$0xf]
      %v1914 = vld [vmem:[%s1906 + $0x1c] sm:$0xf]
      %v1915 = vld [vmem:[%s1906 + $0x20] sm:$0xf]
      %v1916 = vld [vmem:[%s1906 + $0x24] sm:$0xf]
      %v1917 = vld [vmem:[%s1906 + $0x28] sm:$0xf]
      %v1918 = vld [vmem:[%s1906 + $0x2c] sm:$0xf]
      %v1919 = vld [vmem:[%s1906 + $0x30] sm:$0xf]
      %v1920 = vld [vmem:[%s1906 + $0x34] sm:$0xf]
      %v1921 = vld [vmem:[%s1906 + $0x38] sm:$0xf]
      %v1922 = vld [vmem:[%s1906 + $0x3c] sm:$0xf]
      %v1923 = vld [vmem:[%s1906 + $0x40] sm:$0xf]
      %v1924 = vld [vmem:[%s1906 + $0x44] sm:$0xf]
      %v1925 = vld [vmem:[%s1906 + $0x48] sm:$0xf]
      %v1926 = vld [vmem:[%s1906 + $0x4c] sm:$0xf]
      %v1927 = vld [vmem:[%s1906 + $0x50] sm:$0xf]
      %v1928 = vld [vmem:[%s1906 + $0x54] sm:$0xf]
      %v1929 = vld [vmem:[%s1906 + $0x58] sm:$0xf]
      %v1930 = vld [vmem:[%s1906 + $0x5c] sm:$0xf]
      %v1931 = vld [vmem:[%s1906 + $0x60] sm:$0xf]
      %v1932 = vld [vmem:[%s1906 + $0x64] sm:$0xf]
      %v1933 = vld [vmem:[%s1906 + $0x68] sm:$0xf]
      %v1934 = vld [vmem:[%s1906 + $0x6c] sm:$0xf]
      %v1935 = vld [vmem:[%s1906 + $0x70] sm:$0xf]
      %v1936 = vld [vmem:[%s1906 + $0x74] sm:$0xf]
      %v1937 = vld [vmem:[%s1906 + $0x78] sm:$0xf]
      %v1938 = vld [vmem:[%s1906 + $0x7c] sm:$0xf]
      %v1939 = vld [vmem:[%s1906 + $0x80] sm:$0xf]
      %v1940 = vld [vmem:[%s1906 + $0x84] sm:$0xf]
      %v1941 = vld [vmem:[%s1906 + $0x88] sm:$0xf]
      %v1942 = vld [vmem:[%s1906 + $0x8c] sm:$0xf]
      %v1943 = vld [vmem:[%s1906 + $0x90] sm:$0xf]
      %v1944 = vld [vmem:[%s1906 + $0x94] sm:$0xf]
      %v1945 = vld [vmem:[%s1906 + $0x98] sm:$0xf]
      %v1946 = vld [vmem:[%s1906 + $0x9c] sm:$0xf]
      %v1947 = vld [vmem:[%s1906 + $0xa0] sm:$0xf]
      %v1948 = vld [vmem:[%s1906 + $0xa4] sm:$0xf]
      %v1949 = vld [vmem:[%s1906 + $0xa8] sm:$0xf]
      %v1950 = vld [vmem:[%s1906 + $0xac] sm:$0xf]
      %v1951 = vld [vmem:[%s1906 + $0xb0] sm:$0xf]
      %v1952 = vld [vmem:[%s1906 + $0xb4] sm:$0xf]
      %v1953 = vld [vmem:[%s1906 + $0xb8] sm:$0xf]
      %v1954 = vld [vmem:[%s1906 + $0xbc] sm:$0xf]
      %v1955 = vld [vmem:[%s1906 + $0xc0] sm:$0xf]
      %v1956 = vld [vmem:[%s1906 + $0xc4] sm:$0xf]
      %v1957 = vld [vmem:[%s1906 + $0xc8] sm:$0xf]
      %v1958 = vld [vmem:[%s1906 + $0xcc] sm:$0xf]
      %v1959 = vld [vmem:[%s1906 + $0xd0] sm:$0xf]
      %v1960 = vld [vmem:[%s1906 + $0xd4] sm:$0xf]
      %v1961 = vld [vmem:[%s1906 + $0xd8] sm:$0xf]
      %v1962 = vld [vmem:[%s1906 + $0xdc] sm:$0xf]
      %v1963 = vld [vmem:[%s1906 + $0xe0] sm:$0xf]
      %v1964 = vld [vmem:[%s1906 + $0xe4] sm:$0xf]
      %v1965 = vld [vmem:[%s1906 + $0xe8] sm:$0xf]
      %v1966 = vld [vmem:[%s1906 + $0xec] sm:$0xf]
      %v1967 = vld [vmem:[%s1906 + $0xf0] sm:$0xf]
      %v1968 = vld [vmem:[%s1906 + $0xf4] sm:$0xf]
      %v1969 = vld [vmem:[%s1906 + $0xf8] sm:$0xf]
      %v1970 = vld [vmem:[%s1906 + $0xfc] sm:$0xf]
      %v2035 = vunpack.c.l.b16 %v1907
      %v2036 = vunpack.c.l.b16 %v1908
      %v2037 = vunpack.c.l.b16 %v1909
      %v2038 = vunpack.c.l.b16 %v1910
      %v2039 = vunpack.c.l.b16 %v1911
      %v2040 = vunpack.c.l.b16 %v1912
      %v2041 = vunpack.c.l.b16 %v1913
      %v2042 = vunpack.c.l.b16 %v1914
      %v2043 = vunpack.c.l.b16 %v1915
      %v2044 = vunpack.c.l.b16 %v1916
      %v2045 = vunpack.c.l.b16 %v1917
      %v2046 = vunpack.c.l.b16 %v1918
      %v2047 = vunpack.c.l.b16 %v1919
      %v2048 = vunpack.c.l.b16 %v1920
      %v2049 = vunpack.c.l.b16 %v1921
      %v2050 = vunpack.c.l.b16 %v1922
      %v2051 = vunpack.c.l.b16 %v1923
      %v2052 = vunpack.c.l.b16 %v1924
      %v2053 = vunpack.c.l.b16 %v1925
      %v2054 = vunpack.c.l.b16 %v1926
      %v2055 = vunpack.c.l.b16 %v1927
      %v2056 = vunpack.c.l.b16 %v1928
      %v2057 = vunpack.c.l.b16 %v1929
      %v2058 = vunpack.c.l.b16 %v1930
      %v2059 = vunpack.c.l.b16 %v1931
      %v2060 = vunpack.c.l.b16 %v1932
      %v2061 = vunpack.c.l.b16 %v1933
      %v2062 = vunpack.c.l.b16 %v1934
      %v2063 = vunpack.c.l.b16 %v1935
      %v2064 = vunpack.c.l.b16 %v1936
      %v2065 = vunpack.c.l.b16 %v1937
      %v2066 = vunpack.c.l.b16 %v1938
      %v2067 = vunpack.c.l.b16 %v1939
      %v2068 = vunpack.c.l.b16 %v1940
      %v2069 = vunpack.c.l.b16 %v1941
      %v2070 = vunpack.c.l.b16 %v1942
      %v2071 = vunpack.c.l.b16 %v1943
      %v2072 = vunpack.c.l.b16 %v1944
      %v2073 = vunpack.c.l.b16 %v1945
      %v2074 = vunpack.c.l.b16 %v1946
      %v2075 = vunpack.c.l.b16 %v1947
      %v2076 = vunpack.c.l.b16 %v1948
      %v2077 = vunpack.c.l.b16 %v1949
      %v2078 = vunpack.c.l.b16 %v1950
      %v2079 = vunpack.c.l.b16 %v1951
      %v2080 = vunpack.c.l.b16 %v1952
      %v2081 = vunpack.c.l.b16 %v1953
      %v2082 = vunpack.c.l.b16 %v1954
      %v2083 = vunpack.c.l.b16 %v1955
      %v2084 = vunpack.c.l.b16 %v1956
      %v2085 = vunpack.c.l.b16 %v1957
      %v2086 = vunpack.c.l.b16 %v1958
      %v2087 = vunpack.c.l.b16 %v1959
      %v2088 = vunpack.c.l.b16 %v1960
      %v2089 = vunpack.c.l.b16 %v1961
      %v2090 = vunpack.c.l.b16 %v1962
      %v2091 = vunpack.c.l.b16 %v1963
      %v2092 = vunpack.c.l.b16 %v1964
      %v2093 = vunpack.c.l.b16 %v1965
      %v2094 = vunpack.c.l.b16 %v1966
      %v2095 = vunpack.c.l.b16 %v1967
      %v2096 = vunpack.c.l.b16 %v1968
      %v2097 = vunpack.c.l.b16 %v1969
      %v2098 = vunpack.c.l.b16 %v1970
      %v2099 = vpack.c.b16 %v2036, %v2035
      %v2100 = vpack.c.b16 %v2038, %v2037
      %v2101 = vpack.c.b16 %v2040, %v2039
      %v2102 = vpack.c.b16 %v2042, %v2041
      %v2103 = vpack.c.b16 %v2044, %v2043
      %v2104 = vpack.c.b16 %v2046, %v2045
      %v2105 = vpack.c.b16 %v2048, %v2047
      %v2106 = vpack.c.b16 %v2050, %v2049
      %v2107 = vpack.c.b16 %v2052, %v2051
      %v2108 = vpack.c.b16 %v2054, %v2053
      %v2109 = vpack.c.b16 %v2056, %v2055
      %v2110 = vpack.c.b16 %v2058, %v2057
      %v2111 = vpack.c.b16 %v2060, %v2059
      %v2112 = vpack.c.b16 %v2062, %v2061
      %v2113 = vpack.c.b16 %v2064, %v2063
      %v2114 = vpack.c.b16 %v2066, %v2065
      %v2115 = vpack.c.b16 %v2068, %v2067
      %v2116 = vpack.c.b16 %v2070, %v2069
      %v2117 = vpack.c.b16 %v2072, %v2071
      %v2118 = vpack.c.b16 %v2074, %v2073
      %v2119 = vpack.c.b16 %v2076, %v2075
      %v2120 = vpack.c.b16 %v2078, %v2077
      %v2121 = vpack.c.b16 %v2080, %v2079
      %v2122 = vpack.c.b16 %v2082, %v2081
      %v2123 = vpack.c.b16 %v2084, %v2083
      %v2124 = vpack.c.b16 %v2086, %v2085
      %v2125 = vpack.c.b16 %v2088, %v2087
      %v2126 = vpack.c.b16 %v2090, %v2089
      %v2127 = vpack.c.b16 %v2092, %v2091
      %v2128 = vpack.c.b16 %v2094, %v2093
      %v2129 = vpack.c.b16 %v2096, %v2095
      %v2130 = vpack.c.b16 %v2098, %v2097
      %2163 = vmatpush.bf16.msra.mxu0 %v2106
      %2164 = vmatpush.bf16.msra.mxu0 %v2105
      %2165 = vmatpush.bf16.msra.mxu0 %v2104
      %2166 = vmatpush.bf16.msra.mxu0 %v2103
      %2167 = vmatpush.bf16.msra.mxu0 %v2102
      %2168 = vmatpush.bf16.msra.mxu0 %v2101
      %2169 = vmatpush.bf16.msra.mxu0 %v2100
      %2170 = vmatpush.bf16.msra.mxu0 %v2099
      %2171 = vmatmul.bf16.gmra.mxu0 %v1826
      %v2172 = vpop.f32.mrf.mxu0
      %v2173 = vadd.f32 0.0, %v2172
      %v2174 = vpop.f32.mrf.mxu0
      %v2175 = vadd.f32 0.0, %v2174
      %2176 = vmatmul.bf16.gmra.mxu0 %v1827
      %v2177 = vpop.f32.mrf.mxu0
      %v2178 = vadd.f32 0.0, %v2177
      %v2179 = vpop.f32.mrf.mxu0
      %v2180 = vadd.f32 0.0, %v2179
      %2181 = vmatmul.bf16.gmra.mxu0 %v1828
      %v2182 = vpop.f32.mrf.mxu0
      %v2183 = vadd.f32 0.0, %v2182
      %v2184 = vpop.f32.mrf.mxu0
      %v2185 = vadd.f32 0.0, %v2184
      %2186 = vmatmul.bf16.gmra.mxu0 %v1829
      %v2187 = vpop.f32.mrf.mxu0
      %v2188 = vadd.f32 0.0, %v2187
      %v2189 = vpop.f32.mrf.mxu0
      %v2190 = vadd.f32 0.0, %v2189
      %2191 = vdwg.mxu0
      %2192 = vmatpush.bf16.msra.mxu0 %v2114
      %2193 = vmatpush.bf16.msra.mxu0 %v2113
      %2194 = vmatpush.bf16.msra.mxu0 %v2112
      %2195 = vmatpush.bf16.msra.mxu0 %v2111
      %2196 = vmatpush.bf16.msra.mxu0 %v2110
      %2197 = vmatpush.bf16.msra.mxu0 %v2109
      %2198 = vmatpush.bf16.msra.mxu0 %v2108
      %2199 = vmatpush.bf16.msra.mxu0 %v2107
      %2200 = vmatmul.bf16.gmra.mxu0 %v1850
      %v2201 = vpop.f32.mrf.mxu0
      %v2202 = vadd.f32 %v2173, %v2201
      %v2203 = vpop.f32.mrf.mxu0
      %v2204 = vadd.f32 %v2175, %v2203
      %2205 = vmatmul.bf16.gmra.mxu0 %v1851
      %v2206 = vpop.f32.mrf.mxu0
      %v2207 = vadd.f32 %v2178, %v2206
      %v2208 = vpop.f32.mrf.mxu0
      %v2209 = vadd.f32 %v2180, %v2208
      %2210 = vmatmul.bf16.gmra.mxu0 %v1852
      %v2211 = vpop.f32.mrf.mxu0
      %v2212 = vadd.f32 %v2183, %v2211
      %v2213 = vpop.f32.mrf.mxu0
      %v2214 = vadd.f32 %v2185, %v2213
      %2215 = vmatmul.bf16.gmra.mxu0 %v1853
      %v2216 = vpop.f32.mrf.mxu0
      %v2217 = vadd.f32 %v2188, %v2216
      %v2218 = vpop.f32.mrf.mxu0
      %v2219 = vadd.f32 %v2190, %v2218
      %2220 = vdwg.mxu0
      %2221 = vmatpush.bf16.msra.mxu0 %v2122
      %2222 = vmatpush.bf16.msra.mxu0 %v2121
      %2223 = vmatpush.bf16.msra.mxu0 %v2120
      %2224 = vmatpush.bf16.msra.mxu0 %v2119
      %2225 = vmatpush.bf16.msra.mxu0 %v2118
      %2226 = vmatpush.bf16.msra.mxu0 %v2117
      %2227 = vmatpush.bf16.msra.mxu0 %v2116
      %2228 = vmatpush.bf16.msra.mxu0 %v2115
      %2229 = vmatmul.bf16.gmra.mxu0 %v1874
      %v2230 = vpop.f32.mrf.mxu0
      %v2231 = vadd.f32 %v2202, %v2230
      %v2232 = vpop.f32.mrf.mxu0
      %v2233 = vadd.f32 %v2204, %v2232
      %2234 = vmatmul.bf16.gmra.mxu0 %v1875
      %v2235 = vpop.f32.mrf.mxu0
      %v2236 = vadd.f32 %v2207, %v2235
      %v2237 = vpop.f32.mrf.mxu0
      %v2238 = vadd.f32 %v2209, %v2237
      %2239 = vmatmul.bf16.gmra.mxu0 %v1876
      %v2240 = vpop.f32.mrf.mxu0
      %v2241 = vadd.f32 %v2212, %v2240
      %v2242 = vpop.f32.mrf.mxu0
      %v2243 = vadd.f32 %v2214, %v2242
      %2244 = vmatmul.bf16.gmra.mxu0 %v1877
      %v2245 = vpop.f32.mrf.mxu0
      %v2246 = vadd.f32 %v2217, %v2245
      %v2247 = vpop.f32.mrf.mxu0
      %v2248 = vadd.f32 %v2219, %v2247
      %2249 = vdwg.mxu0
      %2250 = vmatpush.bf16.msra.mxu0 %v2130
      %2251 = vmatpush.bf16.msra.mxu0 %v2129
      %2252 = vmatpush.bf16.msra.mxu0 %v2128
      %2253 = vmatpush.bf16.msra.mxu0 %v2127
      %2254 = vmatpush.bf16.msra.mxu0 %v2126
      %2255 = vmatpush.bf16.msra.mxu0 %v2125
      %2256 = vmatpush.bf16.msra.mxu0 %v2124
      %2257 = vmatpush.bf16.msra.mxu0 %v2123
      %2258 = vmatmul.bf16.gmra.mxu0 %v1898
      %v2259 = vpop.f32.mrf.mxu0
      %v2260 = vadd.f32 %v2231, %v2259
      %v2261 = vpop.f32.mrf.mxu0
      %v2262 = vadd.f32 %v2233, %v2261
      %2263 = vmatmul.bf16.gmra.mxu0 %v1899
      %v2264 = vpop.f32.mrf.mxu0
      %v2265 = vadd.f32 %v2236, %v2264
      %v2266 = vpop.f32.mrf.mxu0
      %v2267 = vadd.f32 %v2238, %v2266
      %2268 = vmatmul.bf16.gmra.mxu0 %v1900
      %v2269 = vpop.f32.mrf.mxu0
      %v2270 = vadd.f32 %v2241, %v2269
      %v2271 = vpop.f32.mrf.mxu0
      %v2272 = vadd.f32 %v2243, %v2271
      %2273 = vmatmul.bf16.gmra.mxu0 %v1901
      %v2274 = vpop.f32.mrf.mxu0
      %v2275 = vadd.f32 %v2246, %v2274
      %v2276 = vpop.f32.mrf.mxu0
      %v2277 = vadd.f32 %v2248, %v2276
      %2278 = vdwg.mxu0
      %v2279 = vpack.c.bf16 %v2260, %v2260
      %v2280 = vpack.c.bf16 %v2262, %v2262
      %v2281 = vpack.c.bf16 %v2265, %v2265
      %v2282 = vpack.c.bf16 %v2267, %v2267
      %v2283 = vpack.c.bf16 %v2270, %v2270
      %v2284 = vpack.c.bf16 %v2272, %v2272
      %v2285 = vpack.c.bf16 %v2275, %v2275
      %v2286 = vpack.c.bf16 %v2277, %v2277
      %s2287 = scalar_lea.vmem %s204, 64
      %2288 = vst [vmem:[%s2287] sm:$0xf] %v2279
      %2289 = vst [vmem:[%s2287 + $0x4] sm:$0xf] %v2280
      %2290 = vst [vmem:[%s2287 + $0x8] sm:$0xf] %v2281
      %2291 = vst [vmem:[%s2287 + $0xc] sm:$0xf] %v2282
      %2292 = vst [vmem:[%s2287 + $0x10] sm:$0xf] %v2283
      %2293 = vst [vmem:[%s2287 + $0x14] sm:$0xf] %v2284
      %2294 = vst [vmem:[%s2287 + $0x18] sm:$0xf] %v2285
      %2295 = vst [vmem:[%s2287 + $0x1c] sm:$0xf] %v2286
      %v2296 = vadd.f32 %v2260, %v2262
      %v2297 = vadd.f32 %v2296, %v2265
      %v2298 = vadd.f32 %v2297, %v2267
      %v2299 = vadd.f32 %v2298, %v2270
      %v2300 = vadd.f32 %v2299, %v2272
      %v2301 = vadd.f32 %v2300, %v2275
      %v2302 = vadd.f32 %v2301, %v2277
      %v2303 = vrot.slane %v2302, 4
      %v2304 = vadd.f32 %v2302, %v2303
      %v2305 = vrot.slane %v2304, 2
      %v2306 = vadd.f32 %v2304, %v2305
      %v2307 = vrot.slane %v2306, 1
      %v2308 = vadd.f32 %v2306, %v2307
      %v2309 = vadd.f32 %v1722, %v2308
      %v2310 = vmul.f32 %v2260, %v2260
      %v2311 = vmul.f32 %v2262, %v2262
      %v2312 = vmul.f32 %v2265, %v2265
      %v2313 = vmul.f32 %v2267, %v2267
      %v2314 = vmul.f32 %v2270, %v2270
      %v2315 = vmul.f32 %v2272, %v2272
      %v2316 = vmul.f32 %v2275, %v2275
      %v2317 = vmul.f32 %v2277, %v2277
      %v2318 = vadd.f32 %v2310, %v2311
      %v2319 = vadd.f32 %v2318, %v2312
      %v2320 = vadd.f32 %v2319, %v2313
      %v2321 = vadd.f32 %v2320, %v2314
      %v2322 = vadd.f32 %v2321, %v2315
      %v2323 = vadd.f32 %v2322, %v2316
      %v2324 = vadd.f32 %v2323, %v2317
      %v2325 = vrot.slane %v2324, 4
      %v2326 = vadd.f32 %v2324, %v2325
      %v2327 = vrot.slane %v2326, 2
      %v2328 = vadd.f32 %v2326, %v2327
      %v2329 = vrot.slane %v2328, 1
      %v2330 = vadd.f32 %v2328, %v2329
      %v2331 = vadd.f32 %v1744, %v2330
      %v2332 = vld [vmem:[%s566 + $0x1] sm:$0xff]
      %v2333 = vld [vmem:[%s566 + $0x11] sm:$0xff]
      %v2334 = vld [vmem:[%s566 + $0x21] sm:$0xff]
      %v2335 = vld [vmem:[%s566 + $0x31] sm:$0xff]
      %v2336 = vld [vmem:[%s566 + $0x41] sm:$0xff]
      %v2337 = vld [vmem:[%s566 + $0x51] sm:$0xff]
      %v2338 = vld [vmem:[%s566 + $0x61] sm:$0xff]
      %v2339 = vld [vmem:[%s566 + $0x71] sm:$0xff]
      %v2340 = vpack.c.bf16 %v2332, %v2332
      %v2341 = vpack.c.bf16 %v2333, %v2333
      %v2342 = vpack.c.bf16 %v2334, %v2334
      %v2343 = vpack.c.bf16 %v2335, %v2335
      %v2344 = vpack.c.bf16 %v2336, %v2336
      %v2345 = vpack.c.bf16 %v2337, %v2337
      %v2346 = vpack.c.bf16 %v2338, %v2338
      %v2347 = vpack.c.bf16 %v2339, %v2339
      %v2348 = vld [vmem:[%s566 + $0x2] sm:$0xff]
      %v2349 = vld [vmem:[%s566 + $0x12] sm:$0xff]
      %v2350 = vld [vmem:[%s566 + $0x22] sm:$0xff]
      %v2351 = vld [vmem:[%s566 + $0x32] sm:$0xff]
      %v2352 = vld [vmem:[%s566 + $0x42] sm:$0xff]
      %v2353 = vld [vmem:[%s566 + $0x52] sm:$0xff]
      %v2354 = vld [vmem:[%s566 + $0x62] sm:$0xff]
      %v2355 = vld [vmem:[%s566 + $0x72] sm:$0xff]
      %v2356 = vpack.c.bf16 %v2348, %v2348
      %v2357 = vpack.c.bf16 %v2349, %v2349
      %v2358 = vpack.c.bf16 %v2350, %v2350
      %v2359 = vpack.c.bf16 %v2351, %v2351
      %v2360 = vpack.c.bf16 %v2352, %v2352
      %v2361 = vpack.c.bf16 %v2353, %v2353
      %v2362 = vpack.c.bf16 %v2354, %v2354
      %v2363 = vpack.c.bf16 %v2355, %v2355
      %v2364 = vld [vmem:[%s1777 + $0x1] sm:$0xff]
      %v2365 = vld [vmem:[%s1777 + $0x11] sm:$0xff]
      %v2366 = vld [vmem:[%s1777 + $0x21] sm:$0xff]
      %v2367 = vld [vmem:[%s1777 + $0x31] sm:$0xff]
      %v2368 = vld [vmem:[%s1777 + $0x41] sm:$0xff]
      %v2369 = vld [vmem:[%s1777 + $0x51] sm:$0xff]
      %v2370 = vld [vmem:[%s1777 + $0x61] sm:$0xff]
      %v2371 = vld [vmem:[%s1777 + $0x71] sm:$0xff]
      %v2372 = vpack.c.bf16 %v2364, %v2364
      %v2373 = vpack.c.bf16 %v2365, %v2365
      %v2374 = vpack.c.bf16 %v2366, %v2366
      %v2375 = vpack.c.bf16 %v2367, %v2367
      %v2376 = vpack.c.bf16 %v2368, %v2368
      %v2377 = vpack.c.bf16 %v2369, %v2369
      %v2378 = vpack.c.bf16 %v2370, %v2370
      %v2379 = vpack.c.bf16 %v2371, %v2371
      %v2380 = vld [vmem:[%s1777 + $0x2] sm:$0xff]
      %v2381 = vld [vmem:[%s1777 + $0x12] sm:$0xff]
      %v2382 = vld [vmem:[%s1777 + $0x22] sm:$0xff]
      %v2383 = vld [vmem:[%s1777 + $0x32] sm:$0xff]
      %v2384 = vld [vmem:[%s1777 + $0x42] sm:$0xff]
      %v2385 = vld [vmem:[%s1777 + $0x52] sm:$0xff]
      %v2386 = vld [vmem:[%s1777 + $0x62] sm:$0xff]
      %v2387 = vld [vmem:[%s1777 + $0x72] sm:$0xff]
      %v2388 = vpack.c.bf16 %v2380, %v2380
      %v2389 = vpack.c.bf16 %v2381, %v2381
      %v2390 = vpack.c.bf16 %v2382, %v2382
      %v2391 = vpack.c.bf16 %v2383, %v2383
      %v2392 = vpack.c.bf16 %v2384, %v2384
      %v2393 = vpack.c.bf16 %v2385, %v2385
      %v2394 = vpack.c.bf16 %v2386, %v2386
      %v2395 = vpack.c.bf16 %v2387, %v2387
      %v2404 = vunpack.c.l.b16 %v2340
      %v2405 = vunpack.c.l.b16 %v2341
      %v2406 = vunpack.c.l.b16 %v2342
      %v2407 = vunpack.c.l.b16 %v2343
      %v2408 = vunpack.c.l.b16 %v2344
      %v2409 = vunpack.c.l.b16 %v2345
      %v2410 = vunpack.c.l.b16 %v2346
      %v2411 = vunpack.c.l.b16 %v2347
      %v2412 = vpack.c.b16 %v2405, %v2404
      %v2413 = vpack.c.b16 %v2407, %v2406
      %v2414 = vpack.c.b16 %v2409, %v2408
      %v2415 = vpack.c.b16 %v2411, %v2410
      %v2428 = vunpack.c.l.b16 %v2356
      %v2429 = vunpack.c.l.b16 %v2357
      %v2430 = vunpack.c.l.b16 %v2358
      %v2431 = vunpack.c.l.b16 %v2359
      %v2432 = vunpack.c.l.b16 %v2360
      %v2433 = vunpack.c.l.b16 %v2361
      %v2434 = vunpack.c.l.b16 %v2362
      %v2435 = vunpack.c.l.b16 %v2363
      %v2436 = vpack.c.b16 %v2429, %v2428
      %v2437 = vpack.c.b16 %v2431, %v2430
      %v2438 = vpack.c.b16 %v2433, %v2432
      %v2439 = vpack.c.b16 %v2435, %v2434
      %v2452 = vunpack.c.l.b16 %v2372
      %v2453 = vunpack.c.l.b16 %v2373
      %v2454 = vunpack.c.l.b16 %v2374
      %v2455 = vunpack.c.l.b16 %v2375
      %v2456 = vunpack.c.l.b16 %v2376
      %v2457 = vunpack.c.l.b16 %v2377
      %v2458 = vunpack.c.l.b16 %v2378
      %v2459 = vunpack.c.l.b16 %v2379
      %v2460 = vpack.c.b16 %v2453, %v2452
      %v2461 = vpack.c.b16 %v2455, %v2454
      %v2462 = vpack.c.b16 %v2457, %v2456
      %v2463 = vpack.c.b16 %v2459, %v2458
      %v2476 = vunpack.c.l.b16 %v2388
      %v2477 = vunpack.c.l.b16 %v2389
      %v2478 = vunpack.c.l.b16 %v2390
      %v2479 = vunpack.c.l.b16 %v2391
      %v2480 = vunpack.c.l.b16 %v2392
      %v2481 = vunpack.c.l.b16 %v2393
      %v2482 = vunpack.c.l.b16 %v2394
      %v2483 = vunpack.c.l.b16 %v2395
      %v2484 = vpack.c.b16 %v2477, %v2476
      %v2485 = vpack.c.b16 %v2479, %v2478
      %v2486 = vpack.c.b16 %v2481, %v2480
      %v2487 = vpack.c.b16 %v2483, %v2482
      %s2492 = scalar_lea.vmem %s2, 768
      %v2493 = vld [vmem:[%s2492] sm:$0xf]
      %v2494 = vld [vmem:[%s2492 + $0x4] sm:$0xf]
      %v2495 = vld [vmem:[%s2492 + $0x8] sm:$0xf]
      %v2496 = vld [vmem:[%s2492 + $0xc] sm:$0xf]
      %v2497 = vld [vmem:[%s2492 + $0x10] sm:$0xf]
      %v2498 = vld [vmem:[%s2492 + $0x14] sm:$0xf]
      %v2499 = vld [vmem:[%s2492 + $0x18] sm:$0xf]
      %v2500 = vld [vmem:[%s2492 + $0x1c] sm:$0xf]
      %v2501 = vld [vmem:[%s2492 + $0x20] sm:$0xf]
      %v2502 = vld [vmem:[%s2492 + $0x24] sm:$0xf]
      %v2503 = vld [vmem:[%s2492 + $0x28] sm:$0xf]
      %v2504 = vld [vmem:[%s2492 + $0x2c] sm:$0xf]
      %v2505 = vld [vmem:[%s2492 + $0x30] sm:$0xf]
      %v2506 = vld [vmem:[%s2492 + $0x34] sm:$0xf]
      %v2507 = vld [vmem:[%s2492 + $0x38] sm:$0xf]
      %v2508 = vld [vmem:[%s2492 + $0x3c] sm:$0xf]
      %v2509 = vld [vmem:[%s2492 + $0x40] sm:$0xf]
      %v2510 = vld [vmem:[%s2492 + $0x44] sm:$0xf]
      %v2511 = vld [vmem:[%s2492 + $0x48] sm:$0xf]
      %v2512 = vld [vmem:[%s2492 + $0x4c] sm:$0xf]
      %v2513 = vld [vmem:[%s2492 + $0x50] sm:$0xf]
      %v2514 = vld [vmem:[%s2492 + $0x54] sm:$0xf]
      %v2515 = vld [vmem:[%s2492 + $0x58] sm:$0xf]
      %v2516 = vld [vmem:[%s2492 + $0x5c] sm:$0xf]
      %v2517 = vld [vmem:[%s2492 + $0x60] sm:$0xf]
      %v2518 = vld [vmem:[%s2492 + $0x64] sm:$0xf]
      %v2519 = vld [vmem:[%s2492 + $0x68] sm:$0xf]
      %v2520 = vld [vmem:[%s2492 + $0x6c] sm:$0xf]
      %v2521 = vld [vmem:[%s2492 + $0x70] sm:$0xf]
      %v2522 = vld [vmem:[%s2492 + $0x74] sm:$0xf]
      %v2523 = vld [vmem:[%s2492 + $0x78] sm:$0xf]
      %v2524 = vld [vmem:[%s2492 + $0x7c] sm:$0xf]
      %v2525 = vld [vmem:[%s2492 + $0x80] sm:$0xf]
      %v2526 = vld [vmem:[%s2492 + $0x84] sm:$0xf]
      %v2527 = vld [vmem:[%s2492 + $0x88] sm:$0xf]
      %v2528 = vld [vmem:[%s2492 + $0x8c] sm:$0xf]
      %v2529 = vld [vmem:[%s2492 + $0x90] sm:$0xf]
      %v2530 = vld [vmem:[%s2492 + $0x94] sm:$0xf]
      %v2531 = vld [vmem:[%s2492 + $0x98] sm:$0xf]
      %v2532 = vld [vmem:[%s2492 + $0x9c] sm:$0xf]
      %v2533 = vld [vmem:[%s2492 + $0xa0] sm:$0xf]
      %v2534 = vld [vmem:[%s2492 + $0xa4] sm:$0xf]
      %v2535 = vld [vmem:[%s2492 + $0xa8] sm:$0xf]
      %v2536 = vld [vmem:[%s2492 + $0xac] sm:$0xf]
      %v2537 = vld [vmem:[%s2492 + $0xb0] sm:$0xf]
      %v2538 = vld [vmem:[%s2492 + $0xb4] sm:$0xf]
      %v2539 = vld [vmem:[%s2492 + $0xb8] sm:$0xf]
      %v2540 = vld [vmem:[%s2492 + $0xbc] sm:$0xf]
      %v2541 = vld [vmem:[%s2492 + $0xc0] sm:$0xf]
      %v2542 = vld [vmem:[%s2492 + $0xc4] sm:$0xf]
      %v2543 = vld [vmem:[%s2492 + $0xc8] sm:$0xf]
      %v2544 = vld [vmem:[%s2492 + $0xcc] sm:$0xf]
      %v2545 = vld [vmem:[%s2492 + $0xd0] sm:$0xf]
      %v2546 = vld [vmem:[%s2492 + $0xd4] sm:$0xf]
      %v2547 = vld [vmem:[%s2492 + $0xd8] sm:$0xf]
      %v2548 = vld [vmem:[%s2492 + $0xdc] sm:$0xf]
      %v2549 = vld [vmem:[%s2492 + $0xe0] sm:$0xf]
      %v2550 = vld [vmem:[%s2492 + $0xe4] sm:$0xf]
      %v2551 = vld [vmem:[%s2492 + $0xe8] sm:$0xf]
      %v2552 = vld [vmem:[%s2492 + $0xec] sm:$0xf]
      %v2553 = vld [vmem:[%s2492 + $0xf0] sm:$0xf]
      %v2554 = vld [vmem:[%s2492 + $0xf4] sm:$0xf]
      %v2555 = vld [vmem:[%s2492 + $0xf8] sm:$0xf]
      %v2556 = vld [vmem:[%s2492 + $0xfc] sm:$0xf]
      %v2621 = vunpack.c.l.b16 %v2493
      %v2622 = vunpack.c.l.b16 %v2494
      %v2623 = vunpack.c.l.b16 %v2495
      %v2624 = vunpack.c.l.b16 %v2496
      %v2625 = vunpack.c.l.b16 %v2497
      %v2626 = vunpack.c.l.b16 %v2498
      %v2627 = vunpack.c.l.b16 %v2499
      %v2628 = vunpack.c.l.b16 %v2500
      %v2629 = vunpack.c.l.b16 %v2501
      %v2630 = vunpack.c.l.b16 %v2502
      %v2631 = vunpack.c.l.b16 %v2503
      %v2632 = vunpack.c.l.b16 %v2504
      %v2633 = vunpack.c.l.b16 %v2505
      %v2634 = vunpack.c.l.b16 %v2506
      %v2635 = vunpack.c.l.b16 %v2507
      %v2636 = vunpack.c.l.b16 %v2508
      %v2637 = vunpack.c.l.b16 %v2509
      %v2638 = vunpack.c.l.b16 %v2510
      %v2639 = vunpack.c.l.b16 %v2511
      %v2640 = vunpack.c.l.b16 %v2512
      %v2641 = vunpack.c.l.b16 %v2513
      %v2642 = vunpack.c.l.b16 %v2514
      %v2643 = vunpack.c.l.b16 %v2515
      %v2644 = vunpack.c.l.b16 %v2516
      %v2645 = vunpack.c.l.b16 %v2517
      %v2646 = vunpack.c.l.b16 %v2518
      %v2647 = vunpack.c.l.b16 %v2519
      %v2648 = vunpack.c.l.b16 %v2520
      %v2649 = vunpack.c.l.b16 %v2521
      %v2650 = vunpack.c.l.b16 %v2522
      %v2651 = vunpack.c.l.b16 %v2523
      %v2652 = vunpack.c.l.b16 %v2524
      %v2653 = vunpack.c.l.b16 %v2525
      %v2654 = vunpack.c.l.b16 %v2526
      %v2655 = vunpack.c.l.b16 %v2527
      %v2656 = vunpack.c.l.b16 %v2528
      %v2657 = vunpack.c.l.b16 %v2529
      %v2658 = vunpack.c.l.b16 %v2530
      %v2659 = vunpack.c.l.b16 %v2531
      %v2660 = vunpack.c.l.b16 %v2532
      %v2661 = vunpack.c.l.b16 %v2533
      %v2662 = vunpack.c.l.b16 %v2534
      %v2663 = vunpack.c.l.b16 %v2535
      %v2664 = vunpack.c.l.b16 %v2536
      %v2665 = vunpack.c.l.b16 %v2537
      %v2666 = vunpack.c.l.b16 %v2538
      %v2667 = vunpack.c.l.b16 %v2539
      %v2668 = vunpack.c.l.b16 %v2540
      %v2669 = vunpack.c.l.b16 %v2541
      %v2670 = vunpack.c.l.b16 %v2542
      %v2671 = vunpack.c.l.b16 %v2543
      %v2672 = vunpack.c.l.b16 %v2544
      %v2673 = vunpack.c.l.b16 %v2545
      %v2674 = vunpack.c.l.b16 %v2546
      %v2675 = vunpack.c.l.b16 %v2547
      %v2676 = vunpack.c.l.b16 %v2548
      %v2677 = vunpack.c.l.b16 %v2549
      %v2678 = vunpack.c.l.b16 %v2550
      %v2679 = vunpack.c.l.b16 %v2551
      %v2680 = vunpack.c.l.b16 %v2552
      %v2681 = vunpack.c.l.b16 %v2553
      %v2682 = vunpack.c.l.b16 %v2554
      %v2683 = vunpack.c.l.b16 %v2555
      %v2684 = vunpack.c.l.b16 %v2556
      %v2685 = vpack.c.b16 %v2622, %v2621
      %v2686 = vpack.c.b16 %v2624, %v2623
      %v2687 = vpack.c.b16 %v2626, %v2625
      %v2688 = vpack.c.b16 %v2628, %v2627
      %v2689 = vpack.c.b16 %v2630, %v2629
      %v2690 = vpack.c.b16 %v2632, %v2631
      %v2691 = vpack.c.b16 %v2634, %v2633
      %v2692 = vpack.c.b16 %v2636, %v2635
      %v2693 = vpack.c.b16 %v2638, %v2637
      %v2694 = vpack.c.b16 %v2640, %v2639
      %v2695 = vpack.c.b16 %v2642, %v2641
      %v2696 = vpack.c.b16 %v2644, %v2643
      %v2697 = vpack.c.b16 %v2646, %v2645
      %v2698 = vpack.c.b16 %v2648, %v2647
      %v2699 = vpack.c.b16 %v2650, %v2649
      %v2700 = vpack.c.b16 %v2652, %v2651
      %v2701 = vpack.c.b16 %v2654, %v2653
      %v2702 = vpack.c.b16 %v2656, %v2655
      %v2703 = vpack.c.b16 %v2658, %v2657
      %v2704 = vpack.c.b16 %v2660, %v2659
      %v2705 = vpack.c.b16 %v2662, %v2661
      %v2706 = vpack.c.b16 %v2664, %v2663
      %v2707 = vpack.c.b16 %v2666, %v2665
      %v2708 = vpack.c.b16 %v2668, %v2667
      %v2709 = vpack.c.b16 %v2670, %v2669
      %v2710 = vpack.c.b16 %v2672, %v2671
      %v2711 = vpack.c.b16 %v2674, %v2673
      %v2712 = vpack.c.b16 %v2676, %v2675
      %v2713 = vpack.c.b16 %v2678, %v2677
      %v2714 = vpack.c.b16 %v2680, %v2679
      %v2715 = vpack.c.b16 %v2682, %v2681
      %v2716 = vpack.c.b16 %v2684, %v2683
      %2749 = vmatpush.bf16.msra.mxu0 %v2692
      %2750 = vmatpush.bf16.msra.mxu0 %v2691
      %2751 = vmatpush.bf16.msra.mxu0 %v2690
      %2752 = vmatpush.bf16.msra.mxu0 %v2689
      %2753 = vmatpush.bf16.msra.mxu0 %v2688
      %2754 = vmatpush.bf16.msra.mxu0 %v2687
      %2755 = vmatpush.bf16.msra.mxu0 %v2686
      %2756 = vmatpush.bf16.msra.mxu0 %v2685
      %2757 = vmatmul.bf16.gmra.mxu0 %v2412
      %v2758 = vpop.f32.mrf.mxu0
      %v2759 = vadd.f32 0.0, %v2758
      %v2760 = vpop.f32.mrf.mxu0
      %v2761 = vadd.f32 0.0, %v2760
      %2762 = vmatmul.bf16.gmra.mxu0 %v2413
      %v2763 = vpop.f32.mrf.mxu0
      %v2764 = vadd.f32 0.0, %v2763
      %v2765 = vpop.f32.mrf.mxu0
      %v2766 = vadd.f32 0.0, %v2765
      %2767 = vmatmul.bf16.gmra.mxu0 %v2414
      %v2768 = vpop.f32.mrf.mxu0
      %v2769 = vadd.f32 0.0, %v2768
      %v2770 = vpop.f32.mrf.mxu0
      %v2771 = vadd.f32 0.0, %v2770
      %2772 = vmatmul.bf16.gmra.mxu0 %v2415
      %v2773 = vpop.f32.mrf.mxu0
      %v2774 = vadd.f32 0.0, %v2773
      %v2775 = vpop.f32.mrf.mxu0
      %v2776 = vadd.f32 0.0, %v2775
      %2777 = vdwg.mxu0
      %2778 = vmatpush.bf16.msra.mxu0 %v2700
      %2779 = vmatpush.bf16.msra.mxu0 %v2699
      %2780 = vmatpush.bf16.msra.mxu0 %v2698
      %2781 = vmatpush.bf16.msra.mxu0 %v2697
      %2782 = vmatpush.bf16.msra.mxu0 %v2696
      %2783 = vmatpush.bf16.msra.mxu0 %v2695
      %2784 = vmatpush.bf16.msra.mxu0 %v2694
      %2785 = vmatpush.bf16.msra.mxu0 %v2693
      %2786 = vmatmul.bf16.gmra.mxu0 %v2436
      %v2787 = vpop.f32.mrf.mxu0
      %v2788 = vadd.f32 %v2759, %v2787
      %v2789 = vpop.f32.mrf.mxu0
      %v2790 = vadd.f32 %v2761, %v2789
      %2791 = vmatmul.bf16.gmra.mxu0 %v2437
      %v2792 = vpop.f32.mrf.mxu0
      %v2793 = vadd.f32 %v2764, %v2792
      %v2794 = vpop.f32.mrf.mxu0
      %v2795 = vadd.f32 %v2766, %v2794
      %2796 = vmatmul.bf16.gmra.mxu0 %v2438
      %v2797 = vpop.f32.mrf.mxu0
      %v2798 = vadd.f32 %v2769, %v2797
      %v2799 = vpop.f32.mrf.mxu0
      %v2800 = vadd.f32 %v2771, %v2799
      %2801 = vmatmul.bf16.gmra.mxu0 %v2439
      %v2802 = vpop.f32.mrf.mxu0
      %v2803 = vadd.f32 %v2774, %v2802
      %v2804 = vpop.f32.mrf.mxu0
      %v2805 = vadd.f32 %v2776, %v2804
      %2806 = vdwg.mxu0
      %2807 = vmatpush.bf16.msra.mxu0 %v2708
      %2808 = vmatpush.bf16.msra.mxu0 %v2707
      %2809 = vmatpush.bf16.msra.mxu0 %v2706
      %2810 = vmatpush.bf16.msra.mxu0 %v2705
      %2811 = vmatpush.bf16.msra.mxu0 %v2704
      %2812 = vmatpush.bf16.msra.mxu0 %v2703
      %2813 = vmatpush.bf16.msra.mxu0 %v2702
      %2814 = vmatpush.bf16.msra.mxu0 %v2701
      %2815 = vmatmul.bf16.gmra.mxu0 %v2460
      %v2816 = vpop.f32.mrf.mxu0
      %v2817 = vadd.f32 %v2788, %v2816
      %v2818 = vpop.f32.mrf.mxu0
      %v2819 = vadd.f32 %v2790, %v2818
      %2820 = vmatmul.bf16.gmra.mxu0 %v2461
      %v2821 = vpop.f32.mrf.mxu0
      %v2822 = vadd.f32 %v2793, %v2821
      %v2823 = vpop.f32.mrf.mxu0
      %v2824 = vadd.f32 %v2795, %v2823
      %2825 = vmatmul.bf16.gmra.mxu0 %v2462
      %v2826 = vpop.f32.mrf.mxu0
      %v2827 = vadd.f32 %v2798, %v2826
      %v2828 = vpop.f32.mrf.mxu0
      %v2829 = vadd.f32 %v2800, %v2828
      %2830 = vmatmul.bf16.gmra.mxu0 %v2463
      %v2831 = vpop.f32.mrf.mxu0
      %v2832 = vadd.f32 %v2803, %v2831
      %v2833 = vpop.f32.mrf.mxu0
      %v2834 = vadd.f32 %v2805, %v2833
      %2835 = vdwg.mxu0
      %2836 = vmatpush.bf16.msra.mxu0 %v2716
      %2837 = vmatpush.bf16.msra.mxu0 %v2715
      %2838 = vmatpush.bf16.msra.mxu0 %v2714
      %2839 = vmatpush.bf16.msra.mxu0 %v2713
      %2840 = vmatpush.bf16.msra.mxu0 %v2712
      %2841 = vmatpush.bf16.msra.mxu0 %v2711
      %2842 = vmatpush.bf16.msra.mxu0 %v2710
      %2843 = vmatpush.bf16.msra.mxu0 %v2709
      %2844 = vmatmul.bf16.gmra.mxu0 %v2484
      %v2845 = vpop.f32.mrf.mxu0
      %v2846 = vadd.f32 %v2817, %v2845
      %v2847 = vpop.f32.mrf.mxu0
      %v2848 = vadd.f32 %v2819, %v2847
      %2849 = vmatmul.bf16.gmra.mxu0 %v2485
      %v2850 = vpop.f32.mrf.mxu0
      %v2851 = vadd.f32 %v2822, %v2850
      %v2852 = vpop.f32.mrf.mxu0
      %v2853 = vadd.f32 %v2824, %v2852
      %2854 = vmatmul.bf16.gmra.mxu0 %v2486
      %v2855 = vpop.f32.mrf.mxu0
      %v2856 = vadd.f32 %v2827, %v2855
      %v2857 = vpop.f32.mrf.mxu0
      %v2858 = vadd.f32 %v2829, %v2857
      %2859 = vmatmul.bf16.gmra.mxu0 %v2487
      %v2860 = vpop.f32.mrf.mxu0
      %v2861 = vadd.f32 %v2832, %v2860
      %v2862 = vpop.f32.mrf.mxu0
      %v2863 = vadd.f32 %v2834, %v2862
      %2864 = vdwg.mxu0
      %v2865 = vpack.c.bf16 %v2846, %v2846
      %v2866 = vpack.c.bf16 %v2848, %v2848
      %v2867 = vpack.c.bf16 %v2851, %v2851
      %v2868 = vpack.c.bf16 %v2853, %v2853
      %v2869 = vpack.c.bf16 %v2856, %v2856
      %v2870 = vpack.c.bf16 %v2858, %v2858
      %v2871 = vpack.c.bf16 %v2861, %v2861
      %v2872 = vpack.c.bf16 %v2863, %v2863
      %s2873 = scalar_lea.vmem %s204, 96
      %2874 = vst [vmem:[%s2873] sm:$0xf] %v2865
      %2875 = vst [vmem:[%s2873 + $0x4] sm:$0xf] %v2866
      %2876 = vst [vmem:[%s2873 + $0x8] sm:$0xf] %v2867
      %2877 = vst [vmem:[%s2873 + $0xc] sm:$0xf] %v2868
      %2878 = vst [vmem:[%s2873 + $0x10] sm:$0xf] %v2869
      %2879 = vst [vmem:[%s2873 + $0x14] sm:$0xf] %v2870
      %2880 = vst [vmem:[%s2873 + $0x18] sm:$0xf] %v2871
      %2881 = vst [vmem:[%s2873 + $0x1c] sm:$0xf] %v2872
      %v2882 = vadd.f32 %v2846, %v2848
      %v2883 = vadd.f32 %v2882, %v2851
      %v2884 = vadd.f32 %v2883, %v2853
      %v2885 = vadd.f32 %v2884, %v2856
      %v2886 = vadd.f32 %v2885, %v2858
      %v2887 = vadd.f32 %v2886, %v2861
      %v2888 = vadd.f32 %v2887, %v2863
      %v2889 = vrot.slane %v2888, 4
      %v2890 = vadd.f32 %v2888, %v2889
      %v2891 = vrot.slane %v2890, 2
      %v2892 = vadd.f32 %v2890, %v2891
      %v2893 = vrot.slane %v2892, 1
      %v2894 = vadd.f32 %v2892, %v2893
      %v2895 = vadd.f32 %v2309, %v2894
      %v2896 = vmul.f32 %v2846, %v2846
      %v2897 = vmul.f32 %v2848, %v2848
      %v2898 = vmul.f32 %v2851, %v2851
      %v2899 = vmul.f32 %v2853, %v2853
      %v2900 = vmul.f32 %v2856, %v2856
      %v2901 = vmul.f32 %v2858, %v2858
      %v2902 = vmul.f32 %v2861, %v2861
      %v2903 = vmul.f32 %v2863, %v2863
      %v2904 = vadd.f32 %v2896, %v2897
      %v2905 = vadd.f32 %v2904, %v2898
      %v2906 = vadd.f32 %v2905, %v2899
      %v2907 = vadd.f32 %v2906, %v2900
      %v2908 = vadd.f32 %v2907, %v2901
      %v2909 = vadd.f32 %v2908, %v2902
      %v2910 = vadd.f32 %v2909, %v2903
      %v2911 = vrot.slane %v2910, 4
      %v2912 = vadd.f32 %v2910, %v2911
      %v2913 = vrot.slane %v2912, 2
      %v2914 = vadd.f32 %v2912, %v2913
      %v2915 = vrot.slane %v2914, 1
      %v2916 = vadd.f32 %v2914, %v2915
      %v2917 = vadd.f32 %v2331, %v2916
      %2918 = vst [vmem:[%s208] sm:$0x1] %v2895
      %2919 = vst [vmem:[%s208 + $0x1] sm:$0x1] %v2917
      %p2920 = scmp.lt.s32.totalorder %s16, 1
      %s2921 = scalar_select %p2920, %s16, 1
      %s2922 = smul.addr %s2921, 32
      %s2923 = smul.addr %s2922, 4
      %s2924 = scalar_lea.vmem %s3, %s2923
      %p2925 = scmp.lt.s32.totalorder %s16, 1
      %s2926 = scalar_select %p2925, %s16, 1
      %s2927 = smul.addr %s2926, 2
      %s2928 = scalar_lea.vmem %s4, %s2927
      // Predicated region
      $region33: #{unet_innermost_forward.1} parent=31 // pred_check
        %p2929 = pneg %p102
      $region34: #{unet_innermost_forward.1} parent=31 // pred_check_branch
        %2931 = sbr.rel (%p2929) target = $region36
      $region35: #{unet_innermost_forward.1} parent=31 // pred_region
        _
      $region36: #{unet_innermost_forward.1} parent=31 // pred_fallthru
        _
      // Predicated region
      $region37: #{unet_innermost_forward.1} parent=31 // pred_check
        %p2932 = pneg %p128
      $region38: #{unet_innermost_forward.1} parent=31 // pred_check_branch
        %2934 = sbr.rel (%p2932) target = $region40
      $region39: #{unet_innermost_forward.1} parent=31 // pred_region
        _
      $region40: #{unet_innermost_forward.1} parent=31 // pred_fallthru
        _
    $region32: #{unet_innermost_forward.1} parent=5 // pred_fallthru
      _
    %p2935 = scmp.le.s32.totalorder 2, %s11
    // Predicated region
    $region41: #{unet_innermost_forward.1} parent=5 // pred_check
      %p2936 = pneg %p2935
    $region42: #{unet_innermost_forward.1} parent=5 // pred_check_branch
      %2938 = sbr.rel (%p2936) target = $region44
    $region43: #{unet_innermost_forward.1} parent=5 // pred_region
      %s2939 = ssub.s32 %s11, 2
      // Predicated region
      $region45: #{unet_innermost_forward.1} parent=43 // pred_check
        %p2940 = pneg %p108
      $region46: #{unet_innermost_forward.1} parent=43 // pred_check_branch
        %2942 = sbr.rel (%p2940) target = $region48
      $region47: #{unet_innermost_forward.1} parent=43 // pred_region
        %p2943 = scmp.lt.s32.totalorder %s17, 1
        %s2944 = scalar_select %p2943, %s17, 1
        %s2945 = smul.addr %s2944, 32
        %s2946 = smul.addr %s2945, 4
        %s2947 = scalar_lea.vmem %s3, %s2946
      $region48: #{unet_innermost_forward.1} parent=43 // pred_fallthru
        _
      // Predicated region
      $region49: #{unet_innermost_forward.1} parent=43 // pred_check
        %p2948 = pneg %p134
      $region50: #{unet_innermost_forward.1} parent=43 // pred_check_branch
        %2950 = sbr.rel (%p2948) target = $region52
      $region51: #{unet_innermost_forward.1} parent=43 // pred_region
        %p2951 = scmp.lt.s32.totalorder %s17, 1
        %s2952 = scalar_select %p2951, %s17, 1
        %s2953 = smul.addr %s2952, 2
        %s2954 = scalar_lea.vmem %s4, %s2953
      $region52: #{unet_innermost_forward.1} parent=43 // pred_fallthru
        _
    $region44: #{unet_innermost_forward.1} parent=5 // pred_fallthru
      _
  $region6: #{unet_innermost_forward.1} parent=0 // loop_footer
    %s15 = sadd.s32 1, %s11
  $region7: #{unet_innermost_forward.1} parent=0 // loop_footer_branch
    %10 = sbr.rel target = $region3
  $region8: #{unet_innermost_forward.1} parent=0 // loop_exit
    _

</llo_original>
